<compile_context>
chip_gen: v7x
topology: tpu7x:2x2x1
jax: 0.10.0
libtpu: 0.0.40
codegen_flags: <defaults>
</compile_context>

<pallas_src>
import functools

import jax
import jax.numpy as jnp
from jax import lax
from jax.experimental import pallas as pl
from jax.experimental.pallas import tpu as pltpu


def _birnn_kernel(x_ref,      # (L, TB, E)  f32  time-major embedded inputs
                  lbl_ref,    # (TB, 1)     i32  labels for this batch tile
                  wx_ref,     # (E, 8H)     bf16 [W_ih_fwd^T | W_ih_bwd^T]
                  whf_ref,    # (H, 4H)     f32  W_hh_fwd^T
                  b_ref,      # (1, 8H)     f32  [b_fwd | b_bwd]  (b_ih + b_hh each)
                  w2_ref,     # (2H, CP)    bf16 classifier weight (lane padded)
                  b2_ref,     # (1, CP)     f32  classifier bias   (pads = -1e30)
                  out_ref,    # out: (TB, CP) f32  lanes [0:C]=logits, lane C=CE loss
                  xw_ref,     # scratch: (L, TB, 4H) f32  fwd gate pre-acts (+bias)
                  *, num_classes):
    L, TB, E = x_ref.shape
    H = whf_ref.shape[0]
    H4 = 4 * H
    CP = b2_ref.shape[1]

    # ---- fused input projection for both directions: one bf16 MXU matmul,
    #      f32 accumulation, biases folded in off the recurrence critical path ----
    x_all = x_ref[...].reshape(L * TB, E).astype(jnp.bfloat16)
    xw = jnp.dot(x_all, wx_ref[...], preferred_element_type=jnp.float32)
    xw = (xw + b_ref[...]).reshape(L, TB, 2 * H4)
    xw_ref[...] = xw[:, :, 0:H4]                  # store ONLY the forward gates
    gates_bwd_last = xw[L - 1, :, H4:2 * H4]      # reverse dir only needs t = L-1

    wh_f = whf_ref[...]                           # hoist loop-invariant weights

    def lstm_cell(gates, c_prev):
        # Full-vreg activations (gates is exactly one (8,128)/(16,128) tile),
        # then gate selection.  PyTorch gate order: i, f, g(candidate), o.
        sig = jax.nn.sigmoid(gates)
        th = jnp.tanh(gates)
        i_g = sig[:, 0:H]
        f_g = sig[:, H:2 * H]
        g_g = th[:, 2 * H:3 * H]
        o_g = sig[:, 3 * H:4 * H]
        c = f_g * c_prev + i_g * g_g
        h = o_g * jnp.tanh(c)
        return h, c

    # ---- forward direction: full L-step recurrence, fully unrolled ----
    def fwd_step(t, carry):
        h, c = carry
        gates = xw_ref[t] + jnp.dot(h, wh_f, preferred_element_type=jnp.float32)
        return lstm_cell(gates, c)

    h0 = jnp.zeros((TB, H), jnp.float32)
    c0 = jnp.zeros((TB, H), jnp.float32)
    h_fwd, _ = lax.fori_loop(0, L, fwd_step, (h0, c0), unroll=True)

    # ---- reverse direction: out[:, -1, H:] is ONE cell step from zero state ----
    h_bwd, _ = lstm_cell(gates_bwd_last, c0)

    # ---- classifier on concat(h_fwd, h_bwd) without the concat ----
    w2 = w2_ref[...]
    logits = (jnp.dot(h_fwd.astype(jnp.bfloat16), w2[0:H, :],
                      preferred_element_type=jnp.float32)
              + jnp.dot(h_bwd.astype(jnp.bfloat16), w2[H:2 * H, :],
                        preferred_element_type=jnp.float32)
              + b2_ref[...])                      # (TB, CP); padded lanes = -1e30

    # ---- per-example cross entropy (stable logsumexp; pads vanish in exp) ----
    labels = lbl_ref[...]                         # (TB, 1) int32
    lane = lax.broadcasted_iota(jnp.int32, (TB, CP), 1)
    onehot = (lane == labels).astype(jnp.float32)
    m = jnp.max(logits, axis=-1, keepdims=True)
    lse = m + jnp.log(jnp.sum(jnp.exp(logits - m), axis=-1, keepdims=True))
    correct = jnp.sum(logits * onehot, axis=-1, keepdims=True)
    per_ex_loss = lse - correct                   # (TB, 1)

    # Single lane-dense store: logits in lanes [0:C], per-example loss in lane C.
    out_ref[...] = jnp.where(lane == num_classes, per_ex_loss, logits)


def _tensorcores_per_device():
    """Best-effort detection of TensorCores addressable per JAX device."""
    try:
        kind = jax.devices()[0].device_kind.lower()
    except Exception:
        return 1
    if "lite" in kind or "v5e" in kind or "v6" in kind:
        return 1                     # v5e / v6e: single TensorCore per chip
    if "v7" in kind or "v4" in kind or "v5p" in kind:
        return 2                     # v7x (and v4/v5p megacore): 2 TensorCores
    return 1


def birnn_forward(input_ids, labels, params, *, block_b=None):
    """Pallas forward: returns (loss, logits) matching the PyTorch module."""
    emb, wx_f, wh_f, b_f, wx_b, wh_b, b_b, w2, b2 = params
    B, L = input_ids.shape
    E = emb.shape[1]
    H = wh_f.shape[0]
    C = b2.shape[1]
    # Lane-pad classes to a multiple of 128, always leaving >=1 spare lane for loss.
    CP = ((C + 1 + 127) // 128) * 128

    # Generation-aware batch tile: whole batch on single-TC chips (grid of one step
    # removes per-step overhead and doubles matmul M); split across TCs on v7x.
    if block_b is None:
        n_tc = _tensorcores_per_device()
        TB = B if n_tc <= 1 else max(8, B // n_tc)
    else:
        TB = min(block_b, B)
    if B % TB != 0 or (TB != B and TB % 8 != 0):
        TB = B                                              # safe fallback: one tile

    # Embedding gather + time-major layout (recurrence indexes the leading ref axis).
    x = jnp.take(emb, input_ids, axis=0).astype(jnp.float32)        # (B, L, E)
    x_t = jnp.transpose(x, (1, 0, 2))                               # (L, B, E)

    wx = jnp.concatenate([wx_f, wx_b], axis=1).astype(jnp.bfloat16)  # (E, 8H)
    bias = jnp.concatenate([b_f, b_b], axis=1).astype(jnp.float32)   # (1, 8H)
    neg = jnp.float32(-1e30)
    w2p = jnp.concatenate(
        [w2, jnp.zeros((2 * H, CP - C), jnp.float32)], axis=1
    ).astype(jnp.bfloat16)                                           # (2H, CP)
    b2p = jnp.concatenate(
        [b2, jnp.full((1, CP - C), neg, jnp.float32)], axis=1)       # (1, CP)
    labels2d = labels.astype(jnp.int32).reshape(B, 1)

    out = pl.pallas_call(
        functools.partial(_birnn_kernel, num_classes=C),
        out_shape=jax.ShapeDtypeStruct((B, CP), jnp.float32),
        grid_spec=pltpu.PrefetchScalarGridSpec(
            num_scalar_prefetch=0,
            grid=(B // TB,),
            in_specs=[
                pl.BlockSpec((L, TB, E), lambda i: (0, i, 0)),   # inputs (time-major)
                pl.BlockSpec((TB, 1), lambda i: (i, 0)),         # labels
                pl.BlockSpec((E, 8 * H), lambda i: (0, 0)),      # fused input weights
                pl.BlockSpec((H, 4 * H), lambda i: (0, 0)),      # W_hh forward
                pl.BlockSpec((1, 8 * H), lambda i: (0, 0)),      # fused biases
                pl.BlockSpec((2 * H, CP), lambda i: (0, 0)),     # classifier weight
                pl.BlockSpec((1, CP), lambda i: (0, 0)),         # classifier bias
            ],
            out_specs=pl.BlockSpec((TB, CP), lambda i: (i, 0)),  # logits + loss lane
            scratch_shapes=[pltpu.VMEM((L, TB, 4 * H), jnp.float32)],
        ),
        compiler_params=pltpu.CompilerParams(
            dimension_semantics=("parallel",)),   # batch tiles are independent
    )(x_t, labels2d, wx, wh_f, bias, w2p, b2p)

    logits = out[:, :C]
    loss = jnp.mean(out[:, C])                    # per-example loss lives in lane C
    return loss, logits


def birnn_forward_ref(input_ids, labels, params):
    """Pure-JAX reference (full bidirectional scans, f32) for correctness checking."""
    emb, wx_f, wh_f, b_f, wx_b, wh_b, b_b, w2, b2 = params
    x = jnp.take(emb, input_ids, axis=0).astype(jnp.float32)    # (B, L, E)
    B, L, E = x.shape
    H = wh_f.shape[0]

    def make_step(wx, wh, b):
        def step(carry, xt):
            h, c = carry
            gates = xt @ wx + h @ wh + b
            i = jax.nn.sigmoid(gates[:, :H])
            f = jax.nn.sigmoid(gates[:, H:2 * H])
            g = jnp.tanh(gates[:, 2 * H:3 * H])
            o = jax.nn.sigmoid(gates[:, 3 * H:])
            c = f * c + i * g
            h = o * jnp.tanh(c)
            return (h, c), h
        return step

    x_t = jnp.transpose(x, (1, 0, 2))                           # (L, B, E)
    init = (jnp.zeros((B, H), jnp.float32), jnp.zeros((B, H), jnp.float32))
    _, hs_f = lax.scan(make_step(wx_f, wh_f, b_f), init, x_t)
    _, hs_b = lax.scan(make_step(wx_b, wh_b, b_b), init, x_t[::-1])
    hs_b = hs_b[::-1]                                           # align to time index
    out_last = jnp.concatenate([hs_f[-1], hs_b[-1]], axis=-1)   # output[:, -1, :]
    logits = out_last @ w2 + b2
    logp = jax.nn.log_softmax(logits, axis=-1)
    loss = -jnp.mean(jnp.take_along_axis(logp, labels[:, None], axis=-1))
    return loss, logits


def init_params(key, vocab_size, embed_size, hidden_size, class_num):
    ks = jax.random.split(key, 9)
    s = 0.1
    E, H, C = embed_size, hidden_size, class_num
    emb = jax.random.normal(ks[0], (vocab_size, E), jnp.float32) * s
    # LSTM weights stored transposed vs PyTorch: W_ih (4H,E)->(E,4H), W_hh (4H,H)->(H,4H)
    wx_f = jax.random.normal(ks[1], (E, 4 * H), jnp.float32) * s
    wh_f = jax.random.normal(ks[2], (H, 4 * H), jnp.float32) * s
    b_f = jax.random.normal(ks[3], (1, 4 * H), jnp.float32) * s   # b_ih + b_hh combined
    wx_b = jax.random.normal(ks[4], (E, 4 * H), jnp.float32) * s
    wh_b = jax.random.normal(ks[5], (H, 4 * H), jnp.float32) * s
    b_b = jax.random.normal(ks[6], (1, 4 * H), jnp.float32) * s
    # Linear(2H, C) weight (C, 2H) stored transposed as (2H, C)
    w2 = jax.random.normal(ks[7], (2 * H, C), jnp.float32) * s
    b2 = jax.random.normal(ks[8], (1, C), jnp.float32) * s
    return emb, wx_f, wh_f, b_f, wx_b, wh_b, b_b, w2, b2


if __name__ == "__main__":
    VOCAB, EMBED, HIDDEN, CLASSES = 64, 32, 32, 2   # num_layers=1, bidirectional=True
    B, L = 16, 12

    key = jax.random.PRNGKey(0)
    kp, ki, kl = jax.random.split(key, 3)
    params = init_params(kp, VOCAB, EMBED, HIDDEN, CLASSES)
    input_ids = jax.random.randint(ki, (B, L), 0, VOCAB, dtype=jnp.int32)
    labels = jax.random.randint(kl, (B,), 0, CLASSES, dtype=jnp.int32)

    loss, logits = jax.jit(birnn_forward)(input_ids, labels, params)
    jax.block_until_ready((loss, logits))

    loss_ref, logits_ref = birnn_forward_ref(input_ids, labels, params)
    assert jnp.allclose(logits, logits_ref, atol=3e-3, rtol=3e-3), "logits mismatch"
    assert jnp.allclose(loss, loss_ref, atol=3e-3, rtol=3e-3), "loss mismatch"

    print("KERNEL_OK")
</pallas_src>

<mosaic_0001>
module attributes {stable_mosaic.version = 11 : i64} {
  func.func @_birnn_kernel(%arg0: i32, %arg1: memref<12x16x32xf32, #tpu.memory_space<vmem>>, %arg2: memref<16x1xi32, #tpu.memory_space<vmem>>, %arg3: memref<32x256xbf16, #tpu.memory_space<vmem>>, %arg4: memref<32x128xf32, #tpu.memory_space<vmem>>, %arg5: memref<1x256xf32, #tpu.memory_space<vmem>>, %arg6: memref<64x128xbf16, #tpu.memory_space<vmem>>, %arg7: memref<1x128xf32, #tpu.memory_space<vmem>>, %arg8: memref<16x128xf32, #tpu.memory_space<vmem>>, %arg9: memref<12x16x128xf32, #tpu.memory_space<vmem>>) attributes {dimension_semantics = [#tpu.dimension_semantics<parallel>], iteration_bounds = array<i64: 1>, scalar_prefetch = 0 : i64, scratch_operands = 1 : i64, tpu.core_type = #tpu.core_type<tc>, window_params = [{transform_indices = @transform_0, window_bounds = array<i64: 12, 16, 32>}, {transform_indices = @transform_1, window_bounds = array<i64: 16, 1>}, {pipeline_mode = #tpu.pipeline_mode<synchronous>, transform_indices = @transform_2, window_bounds = array<i64: 32, 256>}, {pipeline_mode = #tpu.pipeline_mode<synchronous>, transform_indices = @transform_3, window_bounds = array<i64: 32, 128>}, {pipeline_mode = #tpu.pipeline_mode<synchronous>, transform_indices = @transform_4, window_bounds = array<i64: 1, 256>}, {pipeline_mode = #tpu.pipeline_mode<synchronous>, transform_indices = @transform_5, window_bounds = array<i64: 64, 128>}, {pipeline_mode = #tpu.pipeline_mode<synchronous>, transform_indices = @transform_6, window_bounds = array<i64: 1, 128>}, {transform_indices = @transform_7, window_bounds = array<i64: 16, 128>}]} {
    %c0 = arith.constant 0 : index
    %c0_0 = arith.constant 0 : index
    %c0_1 = arith.constant 0 : index
    %0 = vector.load %arg1[%c0, %c0_0, %c0_1] : memref<12x16x32xf32, #tpu.memory_space<vmem>>, vector<12x16x32xf32>
    %1 = vector.shape_cast %0 : vector<12x16x32xf32> to vector<192x32xf32>
    %2 = arith.truncf %1 : vector<192x32xf32> to vector<192x32xbf16>
    %c0_2 = arith.constant 0 : index
    %c0_3 = arith.constant 0 : index
    %3 = vector.load %arg3[%c0_2, %c0_3] : memref<32x256xbf16, #tpu.memory_space<vmem>>, vector<32x256xbf16>
    %cst = arith.constant dense<0.000000e+00> : vector<192x256xf32>
    %4 = tpu.matmul %2, %3, %cst {dimension_numbers = #tpu.dot_dimension_numbers<[1], [0], [0], [1], [0, 0, 1, 1], [], []>} : vector<192x32xbf16>, vector<32x256xbf16>, vector<192x256xf32> -> vector<192x256xf32>
    %c0_4 = arith.constant 0 : index
    %c0_5 = arith.constant 0 : index
    %5 = vector.load %arg5[%c0_4, %c0_5] : memref<1x256xf32, #tpu.memory_space<vmem>>, vector<1x256xf32>
    %6 = vector.broadcast %5 : vector<1x256xf32> to vector<192x256xf32>
    %7 = arith.addf %4, %6 : vector<192x256xf32>
    %8 = vector.shape_cast %7 : vector<192x256xf32> to vector<12x16x256xf32>
    %9 = vector.extract_strided_slice %8 {offsets = [0, 0, 0], sizes = [12, 16, 128], strides = [1, 1, 1]} : vector<12x16x256xf32> to vector<12x16x128xf32>
    %c0_6 = arith.constant 0 : index
    %c0_7 = arith.constant 0 : index
    %c0_8 = arith.constant 0 : index
    %10 = vector.load %arg9[%c0_6, %c0_7, %c0_8] : memref<12x16x128xf32, #tpu.memory_space<vmem>>, vector<12x16x128xf32>
    tpu.vector_store %arg9[%c0_6, %c0_7, %c0_8], %9 {strides = array<i32>} : memref<12x16x128xf32, #tpu.memory_space<vmem>>, vector<12x16x128xf32>,
    %11 = vector.extract_strided_slice %8 {offsets = [11, 0, 128], sizes = [1, 16, 128], strides = [1, 1, 1]} : vector<12x16x256xf32> to vector<1x16x128xf32>
    %12 = vector.shape_cast %11 : vector<1x16x128xf32> to vector<16x128xf32>
    %c0_9 = arith.constant 0 : index
    %c0_10 = arith.constant 0 : index
    %13 = vector.load %arg4[%c0_9, %c0_10] : memref<32x128xf32, #tpu.memory_space<vmem>>, vector<32x128xf32>
    %cst_11 = arith.constant 0.000000e+00 : f32
    %14 = vector.broadcast %cst_11 : f32 to vector<16x32xf32>
    %cst_12 = arith.constant 0.000000e+00 : f32
    %15 = vector.broadcast %cst_12 : f32 to vector<16x32xf32>
    %c0_i32 = arith.constant 0 : i32
    %16 = arith.index_cast %c0_i32 : i32 to index
    %c0_13 = arith.constant 0 : index
    %c0_14 = arith.constant 0 : index
    %17 = vector.load %arg9[%16, %c0_13, %c0_14] : memref<12x16x128xf32, #tpu.memory_space<vmem>>, vector<1x16x128xf32>
    %18 = vector.shape_cast %17 : vector<1x16x128xf32> to vector<16x128xf32>
    %cst_15 = arith.constant dense<0.000000e+00> : vector<16x128xf32>
    %19 = tpu.matmul %14, %13, %cst_15 {dimension_numbers = #tpu.dot_dimension_numbers<[1], [0], [0], [1], [0, 0, 1, 1], [], []>} : vector<16x32xf32>, vector<32x128xf32>, vector<16x128xf32> -> vector<16x128xf32>
    %20 = arith.addf %18, %19 : vector<16x128xf32>
    %21 = arith.negf %20 : vector<16x128xf32>
    %22 = math.exp %21 : vector<16x128xf32>
    %cst_16 = arith.constant 1.000000e+00 : f32
    %23 = vector.broadcast %cst_16 : f32 to vector<16x128xf32>
    %24 = arith.addf %23, %22 : vector<16x128xf32>
    %25 = arith.divf %23, %24 : vector<16x128xf32>
    %26 = math.tanh %20 : vector<16x128xf32>
    %27 = vector.extract_strided_slice %25 {offsets = [0, 0], sizes = [16, 32], strides = [1, 1]} : vector<16x128xf32> to vector<16x32xf32>
    %28 = vector.extract_strided_slice %25 {offsets = [0, 32], sizes = [16, 32], strides = [1, 1]} : vector<16x128xf32> to vector<16x32xf32>
    %29 = vector.extract_strided_slice %26 {offsets = [0, 64], sizes = [16, 32], strides = [1, 1]} : vector<16x128xf32> to vector<16x32xf32>
    %30 = vector.extract_strided_slice %25 {offsets = [0, 96], sizes = [16, 32], strides = [1, 1]} : vector<16x128xf32> to vector<16x32xf32>
    %31 = arith.mulf %28, %15 : vector<16x32xf32>
    %32 = arith.mulf %27, %29 : vector<16x32xf32>
    %33 = arith.addf %31, %32 : vector<16x32xf32>
    %34 = math.tanh %33 : vector<16x32xf32>
    %35 = arith.mulf %30, %34 : vector<16x32xf32>
    %c1_i32 = arith.constant 1 : i32
    %36 = arith.index_cast %c1_i32 : i32 to index
    %c0_17 = arith.constant 0 : index
    %c0_18 = arith.constant 0 : index
    %37 = vector.load %arg9[%36, %c0_17, %c0_18] : memref<12x16x128xf32, #tpu.memory_space<vmem>>, vector<1x16x128xf32>
    %38 = vector.shape_cast %37 : vector<1x16x128xf32> to vector<16x128xf32>
    %cst_19 = arith.constant dense<0.000000e+00> : vector<16x128xf32>
    %39 = tpu.matmul %35, %13, %cst_19 {dimension_numbers = #tpu.dot_dimension_numbers<[1], [0], [0], [1], [0, 0, 1, 1], [], []>} : vector<16x32xf32>, vector<32x128xf32>, vector<16x128xf32> -> vector<16x128xf32>
    %40 = arith.addf %38, %39 : vector<16x128xf32>
    %41 = arith.negf %40 : vector<16x128xf32>
    %42 = math.exp %41 : vector<16x128xf32>
    %cst_20 = arith.constant 1.000000e+00 : f32
    %43 = vector.broadcast %cst_20 : f32 to vector<16x128xf32>
    %44 = arith.addf %43, %42 : vector<16x128xf32>
    %45 = arith.divf %43, %44 : vector<16x128xf32>
    %46 = math.tanh %40 : vector<16x128xf32>
    %47 = vector.extract_strided_slice %45 {offsets = [0, 0], sizes = [16, 32], strides = [1, 1]} : vector<16x128xf32> to vector<16x32xf32>
    %48 = vector.extract_strided_slice %45 {offsets = [0, 32], sizes = [16, 32], strides = [1, 1]} : vector<16x128xf32> to vector<16x32xf32>
    %49 = vector.extract_strided_slice %46 {offsets = [0, 64], sizes = [16, 32], strides = [1, 1]} : vector<16x128xf32> to vector<16x32xf32>
    %50 = vector.extract_strided_slice %45 {offsets = [0, 96], sizes = [16, 32], strides = [1, 1]} : vector<16x128xf32> to vector<16x32xf32>
    %51 = arith.mulf %48, %33 : vector<16x32xf32>
    %52 = arith.mulf %47, %49 : vector<16x32xf32>
    %53 = arith.addf %51, %52 : vector<16x32xf32>
    %54 = math.tanh %53 : vector<16x32xf32>
    %55 = arith.mulf %50, %54 : vector<16x32xf32>
    %c2_i32 = arith.constant 2 : i32
    %56 = arith.index_cast %c2_i32 : i32 to index
    %c0_21 = arith.constant 0 : index
    %c0_22 = arith.constant 0 : index
    %57 = vector.load %arg9[%56, %c0_21, %c0_22] : memref<12x16x128xf32, #tpu.memory_space<vmem>>, vector<1x16x128xf32>
    %58 = vector.shape_cast %57 : vector<1x16x128xf32> to vector<16x128xf32>
    %cst_23 = arith.constant dense<0.000000e+00> : vector<16x128xf32>
    %59 = tpu.matmul %55, %13, %cst_23 {dimension_numbers = #tpu.dot_dimension_numbers<[1], [0], [0], [1], [0, 0, 1, 1], [], []>} : vector<16x32xf32>, vector<32x128xf32>, vector<16x128xf32> -> vector<16x128xf32>
    %60 = arith.addf %58, %59 : vector<16x128xf32>
    %61 = arith.negf %60 : vector<16x128xf32>
    %62 = math.exp %61 : vector<16x128xf32>
    %cst_24 = arith.constant 1.000000e+00 : f32
    %63 = vector.broadcast %cst_24 : f32 to vector<16x128xf32>
    %64 = arith.addf %63, %62 : vector<16x128xf32>
    %65 = arith.divf %63, %64 : vector<16x128xf32>
    %66 = math.tanh %60 : vector<16x128xf32>
    %67 = vector.extract_strided_slice %65 {offsets = [0, 0], sizes = [16, 32], strides = [1, 1]} : vector<16x128xf32> to vector<16x32xf32>
    %68 = vector.extract_strided_slice %65 {offsets = [0, 32], sizes = [16, 32], strides = [1, 1]} : vector<16x128xf32> to vector<16x32xf32>
    %69 = vector.extract_strided_slice %66 {offsets = [0, 64], sizes = [16, 32], strides = [1, 1]} : vector<16x128xf32> to vector<16x32xf32>
    %70 = vector.extract_strided_slice %65 {offsets = [0, 96], sizes = [16, 32], strides = [1, 1]} : vector<16x128xf32> to vector<16x32xf32>
    %71 = arith.mulf %68, %53 : vector<16x32xf32>
    %72 = arith.mulf %67, %69 : vector<16x32xf32>
    %73 = arith.addf %71, %72 : vector<16x32xf32>
    %74 = math.tanh %73 : vector<16x32xf32>
    %75 = arith.mulf %70, %74 : vector<16x32xf32>
    %c3_i32 = arith.constant 3 : i32
    %76 = arith.index_cast %c3_i32 : i32 to index
    %c0_25 = arith.constant 0 : index
    %c0_26 = arith.constant 0 : index
    %77 = vector.load %arg9[%76, %c0_25, %c0_26] : memref<12x16x128xf32, #tpu.memory_space<vmem>>, vector<1x16x128xf32>
    %78 = vector.shape_cast %77 : vector<1x16x128xf32> to vector<16x128xf32>
    %cst_27 = arith.constant dense<0.000000e+00> : vector<16x128xf32>
    %79 = tpu.matmul %75, %13, %cst_27 {dimension_numbers = #tpu.dot_dimension_numbers<[1], [0], [0], [1], [0, 0, 1, 1], [], []>} : vector<16x32xf32>, vector<32x128xf32>, vector<16x128xf32> -> vector<16x128xf32>
    %80 = arith.addf %78, %79 : vector<16x128xf32>
    %81 = arith.negf %80 : vector<16x128xf32>
    %82 = math.exp %81 : vector<16x128xf32>
    %cst_28 = arith.constant 1.000000e+00 : f32
    %83 = vector.broadcast %cst_28 : f32 to vector<16x128xf32>
    %84 = arith.addf %83, %82 : vector<16x128xf32>
    %85 = arith.divf %83, %84 : vector<16x128xf32>
    %86 = math.tanh %80 : vector<16x128xf32>
    %87 = vector.extract_strided_slice %85 {offsets = [0, 0], sizes = [16, 32], strides = [1, 1]} : vector<16x128xf32> to vector<16x32xf32>
    %88 = vector.extract_strided_slice %85 {offsets = [0, 32], sizes = [16, 32], strides = [1, 1]} : vector<16x128xf32> to vector<16x32xf32>
    %89 = vector.extract_strided_slice %86 {offsets = [0, 64], sizes = [16, 32], strides = [1, 1]} : vector<16x128xf32> to vector<16x32xf32>
    %90 = vector.extract_strided_slice %85 {offsets = [0, 96], sizes = [16, 32], strides = [1, 1]} : vector<16x128xf32> to vector<16x32xf32>
    %91 = arith.mulf %88, %73 : vector<16x32xf32>
    %92 = arith.mulf %87, %89 : vector<16x32xf32>
    %93 = arith.addf %91, %92 : vector<16x32xf32>
    %94 = math.tanh %93 : vector<16x32xf32>
    %95 = arith.mulf %90, %94 : vector<16x32xf32>
    %c4_i32 = arith.constant 4 : i32
    %96 = arith.index_cast %c4_i32 : i32 to index
    %c0_29 = arith.constant 0 : index
    %c0_30 = arith.constant 0 : index
    %97 = vector.load %arg9[%96, %c0_29, %c0_30] : memref<12x16x128xf32, #tpu.memory_space<vmem>>, vector<1x16x128xf32>
    %98 = vector.shape_cast %97 : vector<1x16x128xf32> to vector<16x128xf32>
    %cst_31 = arith.constant dense<0.000000e+00> : vector<16x128xf32>
    %99 = tpu.matmul %95, %13, %cst_31 {dimension_numbers = #tpu.dot_dimension_numbers<[1], [0], [0], [1], [0, 0, 1, 1], [], []>} : vector<16x32xf32>, vector<32x128xf32>, vector<16x128xf32> -> vector<16x128xf32>
    %100 = arith.addf %98, %99 : vector<16x128xf32>
    %101 = arith.negf %100 : vector<16x128xf32>
    %102 = math.exp %101 : vector<16x128xf32>
    %cst_32 = arith.constant 1.000000e+00 : f32
    %103 = vector.broadcast %cst_32 : f32 to vector<16x128xf32>
    %104 = arith.addf %103, %102 : vector<16x128xf32>
    %105 = arith.divf %103, %104 : vector<16x128xf32>
    %106 = math.tanh %100 : vector<16x128xf32>
    %107 = vector.extract_strided_slice %105 {offsets = [0, 0], sizes = [16, 32], strides = [1, 1]} : vector<16x128xf32> to vector<16x32xf32>
    %108 = vector.extract_strided_slice %105 {offsets = [0, 32], sizes = [16, 32], strides = [1, 1]} : vector<16x128xf32> to vector<16x32xf32>
    %109 = vector.extract_strided_slice %106 {offsets = [0, 64], sizes = [16, 32], strides = [1, 1]} : vector<16x128xf32> to vector<16x32xf32>
    %110 = vector.extract_strided_slice %105 {offsets = [0, 96], sizes = [16, 32], strides = [1, 1]} : vector<16x128xf32> to vector<16x32xf32>
    %111 = arith.mulf %108, %93 : vector<16x32xf32>
    %112 = arith.mulf %107, %109 : vector<16x32xf32>
    %113 = arith.addf %111, %112 : vector<16x32xf32>
    %114 = math.tanh %113 : vector<16x32xf32>
    %115 = arith.mulf %110, %114 : vector<16x32xf32>
    %c5_i32 = arith.constant 5 : i32
    %116 = arith.index_cast %c5_i32 : i32 to index
    %c0_33 = arith.constant 0 : index
    %c0_34 = arith.constant 0 : index
    %117 = vector.load %arg9[%116, %c0_33, %c0_34] : memref<12x16x128xf32, #tpu.memory_space<vmem>>, vector<1x16x128xf32>
    %118 = vector.shape_cast %117 : vector<1x16x128xf32> to vector<16x128xf32>
    %cst_35 = arith.constant dense<0.000000e+00> : vector<16x128xf32>
    %119 = tpu.matmul %115, %13, %cst_35 {dimension_numbers = #tpu.dot_dimension_numbers<[1], [0], [0], [1], [0, 0, 1, 1], [], []>} : vector<16x32xf32>, vector<32x128xf32>, vector<16x128xf32> -> vector<16x128xf32>
    %120 = arith.addf %118, %119 : vector<16x128xf32>
    %121 = arith.negf %120 : vector<16x128xf32>
    %122 = math.exp %121 : vector<16x128xf32>
    %cst_36 = arith.constant 1.000000e+00 : f32
    %123 = vector.broadcast %cst_36 : f32 to vector<16x128xf32>
    %124 = arith.addf %123, %122 : vector<16x128xf32>
    %125 = arith.divf %123, %124 : vector<16x128xf32>
    %126 = math.tanh %120 : vector<16x128xf32>
    %127 = vector.extract_strided_slice %125 {offsets = [0, 0], sizes = [16, 32], strides = [1, 1]} : vector<16x128xf32> to vector<16x32xf32>
    %128 = vector.extract_strided_slice %125 {offsets = [0, 32], sizes = [16, 32], strides = [1, 1]} : vector<16x128xf32> to vector<16x32xf32>
    %129 = vector.extract_strided_slice %126 {offsets = [0, 64], sizes = [16, 32], strides = [1, 1]} : vector<16x128xf32> to vector<16x32xf32>
    %130 = vector.extract_strided_slice %125 {offsets = [0, 96], sizes = [16, 32], strides = [1, 1]} : vector<16x128xf32> to vector<16x32xf32>
    %131 = arith.mulf %128, %113 : vector<16x32xf32>
    %132 = arith.mulf %127, %129 : vector<16x32xf32>
    %133 = arith.addf %131, %132 : vector<16x32xf32>
    %134 = math.tanh %133 : vector<16x32xf32>
    %135 = arith.mulf %130, %134 : vector<16x32xf32>
    %c6_i32 = arith.constant 6 : i32
    %136 = arith.index_cast %c6_i32 : i32 to index
    %c0_37 = arith.constant 0 : index
    %c0_38 = arith.constant 0 : index
    %137 = vector.load %arg9[%136, %c0_37, %c0_38] : memref<12x16x128xf32, #tpu.memory_space<vmem>>, vector<1x16x128xf32>
    %138 = vector.shape_cast %137 : vector<1x16x128xf32> to vector<16x128xf32>
    %cst_39 = arith.constant dense<0.000000e+00> : vector<16x128xf32>
    %139 = tpu.matmul %135, %13, %cst_39 {dimension_numbers = #tpu.dot_dimension_numbers<[1], [0], [0], [1], [0, 0, 1, 1], [], []>} : vector<16x32xf32>, vector<32x128xf32>, vector<16x128xf32> -> vector<16x128xf32>
    %140 = arith.addf %138, %139 : vector<16x128xf32>
    %141 = arith.negf %140 : vector<16x128xf32>
    %142 = math.exp %141 : vector<16x128xf32>
    %cst_40 = arith.constant 1.000000e+00 : f32
    %143 = vector.broadcast %cst_40 : f32 to vector<16x128xf32>
    %144 = arith.addf %143, %142 : vector<16x128xf32>
    %145 = arith.divf %143, %144 : vector<16x128xf32>
    %146 = math.tanh %140 : vector<16x128xf32>
    %147 = vector.extract_strided_slice %145 {offsets = [0, 0], sizes = [16, 32], strides = [1, 1]} : vector<16x128xf32> to vector<16x32xf32>
    %148 = vector.extract_strided_slice %145 {offsets = [0, 32], sizes = [16, 32], strides = [1, 1]} : vector<16x128xf32> to vector<16x32xf32>
    %149 = vector.extract_strided_slice %146 {offsets = [0, 64], sizes = [16, 32], strides = [1, 1]} : vector<16x128xf32> to vector<16x32xf32>
    %150 = vector.extract_strided_slice %145 {offsets = [0, 96], sizes = [16, 32], strides = [1, 1]} : vector<16x128xf32> to vector<16x32xf32>
    %151 = arith.mulf %148, %133 : vector<16x32xf32>
    %152 = arith.mulf %147, %149 : vector<16x32xf32>
    %153 = arith.addf %151, %152 : vector<16x32xf32>
    %154 = math.tanh %153 : vector<16x32xf32>
    %155 = arith.mulf %150, %154 : vector<16x32xf32>
    %c7_i32 = arith.constant 7 : i32
    %156 = arith.index_cast %c7_i32 : i32 to index
    %c0_41 = arith.constant 0 : index
    %c0_42 = arith.constant 0 : index
    %157 = vector.load %arg9[%156, %c0_41, %c0_42] : memref<12x16x128xf32, #tpu.memory_space<vmem>>, vector<1x16x128xf32>
    %158 = vector.shape_cast %157 : vector<1x16x128xf32> to vector<16x128xf32>
    %cst_43 = arith.constant dense<0.000000e+00> : vector<16x128xf32>
    %159 = tpu.matmul %155, %13, %cst_43 {dimension_numbers = #tpu.dot_dimension_numbers<[1], [0], [0], [1], [0, 0, 1, 1], [], []>} : vector<16x32xf32>, vector<32x128xf32>, vector<16x128xf32> -> vector<16x128xf32>
    %160 = arith.addf %158, %159 : vector<16x128xf32>
    %161 = arith.negf %160 : vector<16x128xf32>
    %162 = math.exp %161 : vector<16x128xf32>
    %cst_44 = arith.constant 1.000000e+00 : f32
    %163 = vector.broadcast %cst_44 : f32 to vector<16x128xf32>
    %164 = arith.addf %163, %162 : vector<16x128xf32>
    %165 = arith.divf %163, %164 : vector<16x128xf32>
    %166 = math.tanh %160 : vector<16x128xf32>
    %167 = vector.extract_strided_slice %165 {offsets = [0, 0], sizes = [16, 32], strides = [1, 1]} : vector<16x128xf32> to vector<16x32xf32>
    %168 = vector.extract_strided_slice %165 {offsets = [0, 32], sizes = [16, 32], strides = [1, 1]} : vector<16x128xf32> to vector<16x32xf32>
    %169 = vector.extract_strided_slice %166 {offsets = [0, 64], sizes = [16, 32], strides = [1, 1]} : vector<16x128xf32> to vector<16x32xf32>
    %170 = vector.extract_strided_slice %165 {offsets = [0, 96], sizes = [16, 32], strides = [1, 1]} : vector<16x128xf32> to vector<16x32xf32>
    %171 = arith.mulf %168, %153 : vector<16x32xf32>
    %172 = arith.mulf %167, %169 : vector<16x32xf32>
    %173 = arith.addf %171, %172 : vector<16x32xf32>
    %174 = math.tanh %173 : vector<16x32xf32>
    %175 = arith.mulf %170, %174 : vector<16x32xf32>
    %c8_i32 = arith.constant 8 : i32
    %176 = arith.index_cast %c8_i32 : i32 to index
    %c0_45 = arith.constant 0 : index
    %c0_46 = arith.constant 0 : index
    %177 = vector.load %arg9[%176, %c0_45, %c0_46] : memref<12x16x128xf32, #tpu.memory_space<vmem>>, vector<1x16x128xf32>
    %178 = vector.shape_cast %177 : vector<1x16x128xf32> to vector<16x128xf32>
    %cst_47 = arith.constant dense<0.000000e+00> : vector<16x128xf32>
    %179 = tpu.matmul %175, %13, %cst_47 {dimension_numbers = #tpu.dot_dimension_numbers<[1], [0], [0], [1], [0, 0, 1, 1], [], []>} : vector<16x32xf32>, vector<32x128xf32>, vector<16x128xf32> -> vector<16x128xf32>
    %180 = arith.addf %178, %179 : vector<16x128xf32>
    %181 = arith.negf %180 : vector<16x128xf32>
    %182 = math.exp %181 : vector<16x128xf32>
    %cst_48 = arith.constant 1.000000e+00 : f32
    %183 = vector.broadcast %cst_48 : f32 to vector<16x128xf32>
    %184 = arith.addf %183, %182 : vector<16x128xf32>
    %185 = arith.divf %183, %184 : vector<16x128xf32>
    %186 = math.tanh %180 : vector<16x128xf32>
    %187 = vector.extract_strided_slice %185 {offsets = [0, 0], sizes = [16, 32], strides = [1, 1]} : vector<16x128xf32> to vector<16x32xf32>
    %188 = vector.extract_strided_slice %185 {offsets = [0, 32], sizes = [16, 32], strides = [1, 1]} : vector<16x128xf32> to vector<16x32xf32>
    %189 = vector.extract_strided_slice %186 {offsets = [0, 64], sizes = [16, 32], strides = [1, 1]} : vector<16x128xf32> to vector<16x32xf32>
    %190 = vector.extract_strided_slice %185 {offsets = [0, 96], sizes = [16, 32], strides = [1, 1]} : vector<16x128xf32> to vector<16x32xf32>
    %191 = arith.mulf %188, %173 : vector<16x32xf32>
    %192 = arith.mulf %187, %189 : vector<16x32xf32>
    %193 = arith.addf %191, %192 : vector<16x32xf32>
    %194 = math.tanh %193 : vector<16x32xf32>
    %195 = arith.mulf %190, %194 : vector<16x32xf32>
    %c9_i32 = arith.constant 9 : i32
    %196 = arith.index_cast %c9_i32 : i32 to index
    %c0_49 = arith.constant 0 : index
    %c0_50 = arith.constant 0 : index
    %197 = vector.load %arg9[%196, %c0_49, %c0_50] : memref<12x16x128xf32, #tpu.memory_space<vmem>>, vector<1x16x128xf32>
    %198 = vector.shape_cast %197 : vector<1x16x128xf32> to vector<16x128xf32>
    %cst_51 = arith.constant dense<0.000000e+00> : vector<16x128xf32>
    %199 = tpu.matmul %195, %13, %cst_51 {dimension_numbers = #tpu.dot_dimension_numbers<[1], [0], [0], [1], [0, 0, 1, 1], [], []>} : vector<16x32xf32>, vector<32x128xf32>, vector<16x128xf32> -> vector<16x128xf32>
    %200 = arith.addf %198, %199 : vector<16x128xf32>
    %201 = arith.negf %200 : vector<16x128xf32>
    %202 = math.exp %201 : vector<16x128xf32>
    %cst_52 = arith.constant 1.000000e+00 : f32
    %203 = vector.broadcast %cst_52 : f32 to vector<16x128xf32>
    %204 = arith.addf %203, %202 : vector<16x128xf32>
    %205 = arith.divf %203, %204 : vector<16x128xf32>
    %206 = math.tanh %200 : vector<16x128xf32>
    %207 = vector.extract_strided_slice %205 {offsets = [0, 0], sizes = [16, 32], strides = [1, 1]} : vector<16x128xf32> to vector<16x32xf32>
    %208 = vector.extract_strided_slice %205 {offsets = [0, 32], sizes = [16, 32], strides = [1, 1]} : vector<16x128xf32> to vector<16x32xf32>
    %209 = vector.extract_strided_slice %206 {offsets = [0, 64], sizes = [16, 32], strides = [1, 1]} : vector<16x128xf32> to vector<16x32xf32>
    %210 = vector.extract_strided_slice %205 {offsets = [0, 96], sizes = [16, 32], strides = [1, 1]} : vector<16x128xf32> to vector<16x32xf32>
    %211 = arith.mulf %208, %193 : vector<16x32xf32>
    %212 = arith.mulf %207, %209 : vector<16x32xf32>
    %213 = arith.addf %211, %212 : vector<16x32xf32>
    %214 = math.tanh %213 : vector<16x32xf32>
    %215 = arith.mulf %210, %214 : vector<16x32xf32>
    %c10_i32 = arith.constant 10 : i32
    %216 = arith.index_cast %c10_i32 : i32 to index
    %c0_53 = arith.constant 0 : index
    %c0_54 = arith.constant 0 : index
    %217 = vector.load %arg9[%216, %c0_53, %c0_54] : memref<12x16x128xf32, #tpu.memory_space<vmem>>, vector<1x16x128xf32>
    %218 = vector.shape_cast %217 : vector<1x16x128xf32> to vector<16x128xf32>
    %cst_55 = arith.constant dense<0.000000e+00> : vector<16x128xf32>
    %219 = tpu.matmul %215, %13, %cst_55 {dimension_numbers = #tpu.dot_dimension_numbers<[1], [0], [0], [1], [0, 0, 1, 1], [], []>} : vector<16x32xf32>, vector<32x128xf32>, vector<16x128xf32> -> vector<16x128xf32>
    %220 = arith.addf %218, %219 : vector<16x128xf32>
    %221 = arith.negf %220 : vector<16x128xf32>
    %222 = math.exp %221 : vector<16x128xf32>
    %cst_56 = arith.constant 1.000000e+00 : f32
    %223 = vector.broadcast %cst_56 : f32 to vector<16x128xf32>
    %224 = arith.addf %223, %222 : vector<16x128xf32>
    %225 = arith.divf %223, %224 : vector<16x128xf32>
    %226 = math.tanh %220 : vector<16x128xf32>
    %227 = vector.extract_strided_slice %225 {offsets = [0, 0], sizes = [16, 32], strides = [1, 1]} : vector<16x128xf32> to vector<16x32xf32>
    %228 = vector.extract_strided_slice %225 {offsets = [0, 32], sizes = [16, 32], strides = [1, 1]} : vector<16x128xf32> to vector<16x32xf32>
    %229 = vector.extract_strided_slice %226 {offsets = [0, 64], sizes = [16, 32], strides = [1, 1]} : vector<16x128xf32> to vector<16x32xf32>
    %230 = vector.extract_strided_slice %225 {offsets = [0, 96], sizes = [16, 32], strides = [1, 1]} : vector<16x128xf32> to vector<16x32xf32>
    %231 = arith.mulf %228, %213 : vector<16x32xf32>
    %232 = arith.mulf %227, %229 : vector<16x32xf32>
    %233 = arith.addf %231, %232 : vector<16x32xf32>
    %234 = math.tanh %233 : vector<16x32xf32>
    %235 = arith.mulf %230, %234 : vector<16x32xf32>
    %c11_i32 = arith.constant 11 : i32
    %236 = arith.index_cast %c11_i32 : i32 to index
    %c0_57 = arith.constant 0 : index
    %c0_58 = arith.constant 0 : index
    %237 = vector.load %arg9[%236, %c0_57, %c0_58] : memref<12x16x128xf32, #tpu.memory_space<vmem>>, vector<1x16x128xf32>
    %238 = vector.shape_cast %237 : vector<1x16x128xf32> to vector<16x128xf32>
    %cst_59 = arith.constant dense<0.000000e+00> : vector<16x128xf32>
    %239 = tpu.matmul %235, %13, %cst_59 {dimension_numbers = #tpu.dot_dimension_numbers<[1], [0], [0], [1], [0, 0, 1, 1], [], []>} : vector<16x32xf32>, vector<32x128xf32>, vector<16x128xf32> -> vector<16x128xf32>
    %240 = arith.addf %238, %239 : vector<16x128xf32>
    %241 = arith.negf %240 : vector<16x128xf32>
    %242 = math.exp %241 : vector<16x128xf32>
    %cst_60 = arith.constant 1.000000e+00 : f32
    %243 = vector.broadcast %cst_60 : f32 to vector<16x128xf32>
    %244 = arith.addf %243, %242 : vector<16x128xf32>
    %245 = arith.divf %243, %244 : vector<16x128xf32>
    %246 = math.tanh %240 : vector<16x128xf32>
    %247 = vector.extract_strided_slice %245 {offsets = [0, 0], sizes = [16, 32], strides = [1, 1]} : vector<16x128xf32> to vector<16x32xf32>
    %248 = vector.extract_strided_slice %245 {offsets = [0, 32], sizes = [16, 32], strides = [1, 1]} : vector<16x128xf32> to vector<16x32xf32>
    %249 = vector.extract_strided_slice %246 {offsets = [0, 64], sizes = [16, 32], strides = [1, 1]} : vector<16x128xf32> to vector<16x32xf32>
    %250 = vector.extract_strided_slice %245 {offsets = [0, 96], sizes = [16, 32], strides = [1, 1]} : vector<16x128xf32> to vector<16x32xf32>
    %251 = arith.mulf %248, %233 : vector<16x32xf32>
    %252 = arith.mulf %247, %249 : vector<16x32xf32>
    %253 = arith.addf %251, %252 : vector<16x32xf32>
    %254 = math.tanh %253 : vector<16x32xf32>
    %255 = arith.mulf %250, %254 : vector<16x32xf32>
    %c12_i32 = arith.constant 12 : i32
    %256 = arith.negf %12 : vector<16x128xf32>
    %257 = math.exp %256 : vector<16x128xf32>
    %cst_61 = arith.constant 1.000000e+00 : f32
    %258 = vector.broadcast %cst_61 : f32 to vector<16x128xf32>
    %259 = arith.addf %258, %257 : vector<16x128xf32>
    %260 = arith.divf %258, %259 : vector<16x128xf32>
    %261 = math.tanh %12 : vector<16x128xf32>
    %262 = vector.extract_strided_slice %260 {offsets = [0, 0], sizes = [16, 32], strides = [1, 1]} : vector<16x128xf32> to vector<16x32xf32>
    %263 = vector.extract_strided_slice %260 {offsets = [0, 32], sizes = [16, 32], strides = [1, 1]} : vector<16x128xf32> to vector<16x32xf32>
    %264 = vector.extract_strided_slice %261 {offsets = [0, 64], sizes = [16, 32], strides = [1, 1]} : vector<16x128xf32> to vector<16x32xf32>
    %265 = vector.extract_strided_slice %260 {offsets = [0, 96], sizes = [16, 32], strides = [1, 1]} : vector<16x128xf32> to vector<16x32xf32>
    %266 = arith.mulf %263, %15 : vector<16x32xf32>
    %267 = arith.mulf %262, %264 : vector<16x32xf32>
    %268 = arith.addf %266, %267 : vector<16x32xf32>
    %269 = math.tanh %268 : vector<16x32xf32>
    %270 = arith.mulf %265, %269 : vector<16x32xf32>
    %c0_62 = arith.constant 0 : index
    %c0_63 = arith.constant 0 : index
    %271 = vector.load %arg6[%c0_62, %c0_63] : memref<64x128xbf16, #tpu.memory_space<vmem>>, vector<64x128xbf16>
    %272 = arith.truncf %255 : vector<16x32xf32> to vector<16x32xbf16>
    %273 = vector.extract_strided_slice %271 {offsets = [0, 0], sizes = [32, 128], strides = [1, 1]} : vector<64x128xbf16> to vector<32x128xbf16>
    %cst_64 = arith.constant dense<0.000000e+00> : vector<16x128xf32>
    %274 = tpu.matmul %272, %273, %cst_64 {dimension_numbers = #tpu.dot_dimension_numbers<[1], [0], [0], [1], [0, 0, 1, 1], [], []>} : vector<16x32xbf16>, vector<32x128xbf16>, vector<16x128xf32> -> vector<16x128xf32>
    %275 = arith.truncf %270 : vector<16x32xf32> to vector<16x32xbf16>
    %276 = vector.extract_strided_slice %271 {offsets = [32, 0], sizes = [32, 128], strides = [1, 1]} : vector<64x128xbf16> to vector<32x128xbf16>
    %cst_65 = arith.constant dense<0.000000e+00> : vector<16x128xf32>
    %277 = tpu.matmul %275, %276, %cst_65 {dimension_numbers = #tpu.dot_dimension_numbers<[1], [0], [0], [1], [0, 0, 1, 1], [], []>} : vector<16x32xbf16>, vector<32x128xbf16>, vector<16x128xf32> -> vector<16x128xf32>
    %278 = arith.addf %274, %277 : vector<16x128xf32>
    %c0_66 = arith.constant 0 : index
    %c0_67 = arith.constant 0 : index
    %279 = vector.load %arg7[%c0_66, %c0_67] : memref<1x128xf32, #tpu.memory_space<vmem>>, vector<1x128xf32>
    %280 = vector.broadcast %279 : vector<1x128xf32> to vector<16x128xf32>
    %281 = arith.addf %278, %280 : vector<16x128xf32>
    %c0_68 = arith.constant 0 : index
    %c0_69 = arith.constant 0 : index
    %282 = vector.load %arg2[%c0_68, %c0_69] : memref<16x1xi32, #tpu.memory_space<vmem>>, vector<16x1xi32>
    %283 = tpu.iota {dimensions = array<i32: 1>} : vector<16x128xi32>
    %284 = vector.broadcast %282 : vector<16x1xi32> to vector<16x128xi32>
    %285 = arith.cmpi eq, %283, %284 : vector<16x128xi32>
    %286 = arith.extui %285 : vector<16x128xi1> to vector<16x128xi32>
    %287 = arith.sitofp %286 : vector<16x128xi32> to vector<16x128xf32>
    %cst_70 = arith.constant dense<0xFF800000> : vector<16xf32>
    %288 = vector.multi_reduction <maximumf>, %281, %cst_70 [1] : vector<16x128xf32> to vector<16xf32>
    %289 = vector.shape_cast %288 : vector<16xf32> to vector<16x1xf32>
    %290 = vector.broadcast %289 : vector<16x1xf32> to vector<16x128xf32>
    %291 = arith.subf %281, %290 : vector<16x128xf32>
    %292 = math.exp %291 : vector<16x128xf32>
    %cst_71 = arith.constant dense<0.000000e+00> : vector<16xf32>
    %293 = vector.multi_reduction <add>, %292, %cst_71 [1] : vector<16x128xf32> to vector<16xf32>
    %294 = vector.shape_cast %293 : vector<16xf32> to vector<16x1xf32>
    %295 = math.log %294 : vector<16x1xf32>
    %296 = arith.addf %289, %295 : vector<16x1xf32>
    %297 = arith.mulf %281, %287 : vector<16x128xf32>
    %cst_72 = arith.constant dense<0.000000e+00> : vector<16xf32>
    %298 = vector.multi_reduction <add>, %297, %cst_72 [1] : vector<16x128xf32> to vector<16xf32>
    %299 = vector.shape_cast %298 : vector<16xf32> to vector<16x1xf32>
    %300 = arith.subf %296, %299 : vector<16x1xf32>
    %c2_i32_73 = arith.constant 2 : i32
    %301 = vector.broadcast %c2_i32_73 : i32 to vector<16x128xi32>
    %302 = arith.cmpi eq, %283, %301 : vector<16x128xi32>
    %303 = vector.shape_cast %300 : vector<16x1xf32> to vector<16x1xf32>
    %304 = vector.broadcast %303 : vector<16x1xf32> to vector<16x128xf32>
    %305 = arith.select %302, %304, %281 : vector<16x128xi1>, vector<16x128xf32>
    %c0_74 = arith.constant 0 : index
    %c0_75 = arith.constant 0 : index
    %306 = vector.load %arg8[%c0_74, %c0_75] : memref<16x128xf32, #tpu.memory_space<vmem>>, vector<16x128xf32>
    tpu.vector_store %arg8[%c0_74, %c0_75], %305 {strides = array<i32>} : memref<16x128xf32, #tpu.memory_space<vmem>>, vector<16x128xf32>,
    return
  }
  func.func @transform_0(%arg0: i32) -> (i32, i32, i32) {
    %c0_i32 = arith.constant 0 : i32
    %c0_i32_0 = arith.constant 0 : i32
    %c0_i32_1 = arith.constant 0 : i32
    return %c0_i32, %arg0, %c0_i32_0 : i32, i32, i32
  }
  func.func @transform_1(%arg0: i32) -> (i32, i32) {
    %c0_i32 = arith.constant 0 : i32
    %c0_i32_0 = arith.constant 0 : i32
    return %arg0, %c0_i32 : i32, i32
  }
  func.func @transform_2(%arg0: i32) -> (i32, i32) {
    %c0_i32 = arith.constant 0 : i32
    %c0_i32_0 = arith.constant 0 : i32
    %c0_i32_1 = arith.constant 0 : i32
    return %c0_i32, %c0_i32_0 : i32, i32
  }
  func.func @transform_3(%arg0: i32) -> (i32, i32) {
    %c0_i32 = arith.constant 0 : i32
    %c0_i32_0 = arith.constant 0 : i32
    %c0_i32_1 = arith.constant 0 : i32
    return %c0_i32, %c0_i32_0 : i32, i32
  }
  func.func @transform_4(%arg0: i32) -> (i32, i32) {
    %c0_i32 = arith.constant 0 : i32
    %c0_i32_0 = arith.constant 0 : i32
    %c0_i32_1 = arith.constant 0 : i32
    return %c0_i32, %c0_i32_0 : i32, i32
  }
  func.func @transform_5(%arg0: i32) -> (i32, i32) {
    %c0_i32 = arith.constant 0 : i32
    %c0_i32_0 = arith.constant 0 : i32
    %c0_i32_1 = arith.constant 0 : i32
    return %c0_i32, %c0_i32_0 : i32, i32
  }
  func.func @transform_6(%arg0: i32) -> (i32, i32) {
    %c0_i32 = arith.constant 0 : i32
    %c0_i32_0 = arith.constant 0 : i32
    %c0_i32_1 = arith.constant 0 : i32
    return %c0_i32, %c0_i32_0 : i32, i32
  }
  func.func @transform_7(%arg0: i32) -> (i32, i32) {
    %c0_i32 = arith.constant 0 : i32
    %c0_i32_0 = arith.constant 0 : i32
    return %arg0, %c0_i32 : i32, i32
  }
}

</mosaic_0001>

<llo_original>
// kernel: birnn_forward.1
$region0: #{birnn_forward.1}
  #allocation0 [shape = 'u32[]', space=smem, size = 0x4, offset = 0x4, fixed_abs, tag = 'smem constant byte address 0x4 - core index']
  #allocation1 [shape = 'u32[144,128]{1,0:T(1,128)}', space=vmem, size = 0x12000, scoped, tag = 'internal scratch']
  #allocation2 [shape = 'f32[12,16,128]{2,1,0:T(8,128)}', space=vmem, size = 0x18000, scoped, tag = 'scratch operand']
  %s0 = inlined_call_operand.vmem [shape: f32[12,16,32], index: 0, kind: input, shape index: {}]
  %s1 = inlined_call_operand.vmem [shape: s32[16,1], index: 1, kind: input, shape index: {}]
  %s2 = inlined_call_operand.vmem [shape: bf16[32,256], index: 2, kind: input, shape index: {}]
  %s3 = inlined_call_operand.vmem [shape: f32[32,128], index: 3, kind: input, shape index: {}]
  %s4 = inlined_call_operand.vmem [shape: f32[1,256], index: 4, kind: input, shape index: {}]
  %s5 = inlined_call_operand.vmem [shape: bf16[64,128], index: 5, kind: input, shape index: {}]
  %s6 = inlined_call_operand.vmem [shape: f32[1,128], index: 6, kind: input, shape index: {}]
  %s7 = inlined_call_operand.vmem [shape: f32[16,128], index: 7, kind: output, shape index: {}]
  %s8 = sld [smem:[#allocation0]]
  $region38: #{birnn_forward.1} parent=0
    _
  %s10 = ssub.s32 1, %s8
  %s11 = scalar_select 0, %s10, %s8
  // Predicated region
  $region2: #{birnn_forward.1} parent=0 // pred_check
    _
  $region3: #{birnn_forward.1} parent=0 // pred_check_branch
    %13 = sbr.rel (0) target = $region5
  $region4: #{birnn_forward.1} parent=0 // pred_region
    _
  $region5: #{birnn_forward.1} parent=0 // pred_fallthru
    _
  // Predicated region
  $region6: #{birnn_forward.1} parent=0 // pred_check
    _
  $region7: #{birnn_forward.1} parent=0 // pred_check_branch
    %15 = sbr.rel (0) target = $region9
  $region8: #{birnn_forward.1} parent=0 // pred_region
    _
  $region9: #{birnn_forward.1} parent=0 // pred_fallthru
    _
  // Predicated region
  $region10: #{birnn_forward.1} parent=0 // pred_check
    _
  $region11: #{birnn_forward.1} parent=0 // pred_check_branch
    %17 = sbr.rel (0) target = $region13
  $region12: #{birnn_forward.1} parent=0 // pred_region
    _
  $region13: #{birnn_forward.1} parent=0 // pred_fallthru
    _
  // Predicated region
  $region14: #{birnn_forward.1} parent=0 // pred_check
    _
  $region15: #{birnn_forward.1} parent=0 // pred_check_branch
    %19 = sbr.rel (0) target = $region17
  $region16: #{birnn_forward.1} parent=0 // pred_region
    _
  $region17: #{birnn_forward.1} parent=0 // pred_fallthru
    _
  // Predicated region
  $region18: #{birnn_forward.1} parent=0 // pred_check
    _
  $region19: #{birnn_forward.1} parent=0 // pred_check_branch
    %21 = sbr.rel (0) target = $region21
  $region20: #{birnn_forward.1} parent=0 // pred_region
    _
  $region21: #{birnn_forward.1} parent=0 // pred_fallthru
    _
  // Predicated region
  $region22: #{birnn_forward.1} parent=0 // pred_check
    _
  $region23: #{birnn_forward.1} parent=0 // pred_check_branch
    %23 = sbr.rel (0) target = $region25
  $region24: #{birnn_forward.1} parent=0 // pred_region
    _
  $region25: #{birnn_forward.1} parent=0 // pred_fallthru
    _
  // Predicated region
  $region26: #{birnn_forward.1} parent=0 // pred_check
    _
  $region27: #{birnn_forward.1} parent=0 // pred_check_branch
    %25 = sbr.rel (0) target = $region29
  $region28: #{birnn_forward.1} parent=0 // pred_region
    _
  $region29: #{birnn_forward.1} parent=0 // pred_fallthru
    _
  %v27 = vld [vmem:[%s0] sm:$0xff]
  %v28 = vld [vmem:[%s0 + $0x8] sm:$0xff]
  %v29 = vld [vmem:[%s0 + $0x10] sm:$0xff]
  %v30 = vld [vmem:[%s0 + $0x18] sm:$0xff]
  %v31 = vld [vmem:[%s0 + $0x20] sm:$0xff]
  %v32 = vld [vmem:[%s0 + $0x28] sm:$0xff]
  %v33 = vld [vmem:[%s0 + $0x30] sm:$0xff]
  %v34 = vld [vmem:[%s0 + $0x38] sm:$0xff]
  %v35 = vld [vmem:[%s0 + $0x40] sm:$0xff]
  %v36 = vld [vmem:[%s0 + $0x48] sm:$0xff]
  %v37 = vld [vmem:[%s0 + $0x50] sm:$0xff]
  %v38 = vld [vmem:[%s0 + $0x58] sm:$0xff]
  %v39 = vld [vmem:[%s0 + $0x60] sm:$0xff]
  %v40 = vld [vmem:[%s0 + $0x68] sm:$0xff]
  %v41 = vld [vmem:[%s0 + $0x70] sm:$0xff]
  %v42 = vld [vmem:[%s0 + $0x78] sm:$0xff]
  %v43 = vld [vmem:[%s0 + $0x80] sm:$0xff]
  %v44 = vld [vmem:[%s0 + $0x88] sm:$0xff]
  %v45 = vld [vmem:[%s0 + $0x90] sm:$0xff]
  %v46 = vld [vmem:[%s0 + $0x98] sm:$0xff]
  %v47 = vld [vmem:[%s0 + $0xa0] sm:$0xff]
  %v48 = vld [vmem:[%s0 + $0xa8] sm:$0xff]
  %v49 = vld [vmem:[%s0 + $0xb0] sm:$0xff]
  %v50 = vld [vmem:[%s0 + $0xb8] sm:$0xff]
  %v51 = vpack.c.bf16 %v28, %v27
  %v52 = vpack.c.bf16 %v30, %v29
  %v53 = vpack.c.bf16 %v32, %v31
  %v54 = vpack.c.bf16 %v34, %v33
  %v55 = vpack.c.bf16 %v36, %v35
  %v56 = vpack.c.bf16 %v38, %v37
  %v57 = vpack.c.bf16 %v40, %v39
  %v58 = vpack.c.bf16 %v42, %v41
  %v59 = vpack.c.bf16 %v44, %v43
  %v60 = vpack.c.bf16 %v46, %v45
  %v61 = vpack.c.bf16 %v48, %v47
  %v62 = vpack.c.bf16 %v50, %v49
  %v63 = vld [vmem:[%s2] sm:$0xff]
  %v64 = vld [vmem:[%s2 + $0x8] sm:$0xff]
  %v65 = vld [vmem:[%s2 + $0x10] sm:$0xff]
  %v66 = vld [vmem:[%s2 + $0x18] sm:$0xff]
  %v67 = vld [vmem:[%s4] sm:$0x3]
  %v69 = vlaneseq
  %v70 = vshrl.u32 %v69, 7
  %v71 = vsub.s32 0, %v70
  %v72 = vrot.slane %v67, %v71
  %v73 = vlaneseq
  %v74 = vshrl.u32 %v73, 7
  %v75 = vsub.s32 1, %v74
  %v76 = vrot.slane %v67, %v75
  %v83 = vunpack.c.l.b16 %v63
  %v84 = vunpack.c.h.b16 %v63
  %v85 = vunpack.c.l.b16 %v64
  %v86 = vunpack.c.h.b16 %v64
  %v87 = vunpack.c.l.b16 %v65
  %v88 = vunpack.c.h.b16 %v65
  %v89 = vunpack.c.l.b16 %v66
  %v90 = vunpack.c.h.b16 %v66
  %v91 = vpack.c.b16 %v85, %v83
  %v92 = vpack.c.b16 %v86, %v84
  %v93 = vpack.c.b16 %v89, %v87
  %v94 = vpack.c.b16 %v90, %v88
  %vm99 = vcmask 261120
  %v101 = vsel %vm99, %v51, 0
  %v104 = vsel %vm99, %v52, 0
  %v107 = vsel %vm99, %v53, 0
  %v110 = vsel %vm99, %v54, 0
  %v113 = vsel %vm99, %v55, 0
  %v116 = vsel %vm99, %v56, 0
  %v119 = vsel %vm99, %v57, 0
  %v122 = vsel %vm99, %v58, 0
  %v125 = vsel %vm99, %v59, 0
  %v128 = vsel %vm99, %v60, 0
  %v131 = vsel %vm99, %v61, 0
  %v134 = vsel %vm99, %v62, 0
  %136 = vmatprep.subr.bf16.mxu0 %v92
  %137 = vmatpush1.bf16.msra.mxu0 %v91
  %138 = vmatprep.subr.bf16.mxu0 %v94
  %139 = vmatpush1.bf16.msra.mxu0 %v93
  %140 = vmatprep.subr.bf16.mxu0 0
  %141 = vmatpush1.bf16.msra.mxu0 0
  %142 = vmatprep.subr.bf16.mxu0 0
  %143 = vmatpush1.bf16.msra.mxu0 0
  %144 = vmatprep.subr.bf16.mxu0 0
  %145 = vmatpush1.bf16.msra.mxu0 0
  %146 = vmatprep.subr.bf16.mxu0 0
  %147 = vmatpush1.bf16.msra.mxu0 0
  %148 = vmatprep.subr.bf16.mxu0 0
  %149 = vmatpush1.bf16.msra.mxu0 0
  %150 = vmatprep.subr.bf16.mxu0 0
  %151 = vmatpush1.bf16.msra.mxu0 0
  %152 = vmatprep.subr.bf16.mxu0 0
  %153 = vmatpush1.bf16.msra.mxu0 0
  %154 = vmatprep.subr.bf16.mxu0 0
  %155 = vmatpush1.bf16.msra.mxu0 0
  %156 = vmatprep.subr.bf16.mxu0 0
  %157 = vmatpush1.bf16.msra.mxu0 0
  %158 = vmatprep.subr.bf16.mxu0 0
  %159 = vmatpush1.bf16.msra.mxu0 0
  %160 = vmatprep.subr.bf16.mxu0 0
  %161 = vmatpush1.bf16.msra.mxu0 0
  %162 = vmatprep.subr.bf16.mxu0 0
  %163 = vmatpush1.bf16.msra.mxu0 0
  %164 = vmatprep.subr.bf16.mxu0 0
  %165 = vmatpush1.bf16.msra.mxu0 0
  %166 = vmatprep.subr.bf16.mxu0 0
  %167 = vmatpush1.bf16.msra.mxu0 0
  %168 = vmatprep.mubr.bf16.mxu0 0
  %169 = vmatmul.mubr.bf16.gmra.mrb[0].mxu0 %v101
  %v170 = vpop.f32.mrb[0].mxu0
  %v171 = vadd.f32 %v72, %v170
  %v172 = vpop.f32.mrb[0].mxu0
  %v173 = vpop.f32.mrb[0].mxu0
  %v174 = vadd.f32 %v72, %v173
  %v175 = vpop.f32.mrb[0].mxu0
  %176 = vmatprep.mubr.bf16.mxu0 0
  %177 = vmatmul.mubr.bf16.gmra.mrb[0].mxu0 %v104
  %v178 = vpop.f32.mrb[0].mxu0
  %v179 = vadd.f32 %v72, %v178
  %v180 = vpop.f32.mrb[0].mxu0
  %v181 = vpop.f32.mrb[0].mxu0
  %v182 = vadd.f32 %v72, %v181
  %v183 = vpop.f32.mrb[0].mxu0
  %184 = vmatprep.mubr.bf16.mxu0 0
  %185 = vmatmul.mubr.bf16.gmra.mrb[0].mxu0 %v107
  %v186 = vpop.f32.mrb[0].mxu0
  %v187 = vadd.f32 %v72, %v186
  %v188 = vpop.f32.mrb[0].mxu0
  %v189 = vpop.f32.mrb[0].mxu0
  %v190 = vadd.f32 %v72, %v189
  %v191 = vpop.f32.mrb[0].mxu0
  %192 = vmatprep.mubr.bf16.mxu0 0
  %193 = vmatmul.mubr.bf16.gmra.mrb[0].mxu0 %v110
  %v194 = vpop.f32.mrb[0].mxu0
  %v195 = vadd.f32 %v72, %v194
  %v196 = vpop.f32.mrb[0].mxu0
  %v197 = vpop.f32.mrb[0].mxu0
  %v198 = vadd.f32 %v72, %v197
  %v199 = vpop.f32.mrb[0].mxu0
  %200 = vmatprep.mubr.bf16.mxu0 0
  %201 = vmatmul.mubr.bf16.gmra.mrb[0].mxu0 %v113
  %v202 = vpop.f32.mrb[0].mxu0
  %v203 = vadd.f32 %v72, %v202
  %v204 = vpop.f32.mrb[0].mxu0
  %v205 = vpop.f32.mrb[0].mxu0
  %v206 = vadd.f32 %v72, %v205
  %v207 = vpop.f32.mrb[0].mxu0
  %208 = vmatprep.mubr.bf16.mxu0 0
  %209 = vmatmul.mubr.bf16.gmra.mrb[0].mxu0 %v116
  %v210 = vpop.f32.mrb[0].mxu0
  %v211 = vadd.f32 %v72, %v210
  %v212 = vpop.f32.mrb[0].mxu0
  %v213 = vpop.f32.mrb[0].mxu0
  %v214 = vadd.f32 %v72, %v213
  %v215 = vpop.f32.mrb[0].mxu0
  %216 = vmatprep.mubr.bf16.mxu0 0
  %217 = vmatmul.mubr.bf16.gmra.mrb[0].mxu0 %v119
  %v218 = vpop.f32.mrb[0].mxu0
  %v219 = vadd.f32 %v72, %v218
  %v220 = vpop.f32.mrb[0].mxu0
  %v221 = vpop.f32.mrb[0].mxu0
  %v222 = vadd.f32 %v72, %v221
  %v223 = vpop.f32.mrb[0].mxu0
  %224 = vmatprep.mubr.bf16.mxu0 0
  %225 = vmatmul.mubr.bf16.gmra.mrb[0].mxu0 %v122
  %v226 = vpop.f32.mrb[0].mxu0
  %v227 = vadd.f32 %v72, %v226
  %v228 = vpop.f32.mrb[0].mxu0
  %v229 = vpop.f32.mrb[0].mxu0
  %v230 = vadd.f32 %v72, %v229
  %v231 = vpop.f32.mrb[0].mxu0
  %232 = vmatprep.mubr.bf16.mxu0 0
  %233 = vmatmul.mubr.bf16.gmra.mrb[0].mxu0 %v125
  %v234 = vpop.f32.mrb[0].mxu0
  %v235 = vadd.f32 %v72, %v234
  %v236 = vpop.f32.mrb[0].mxu0
  %v237 = vpop.f32.mrb[0].mxu0
  %v238 = vadd.f32 %v72, %v237
  %v239 = vpop.f32.mrb[0].mxu0
  %240 = vmatprep.mubr.bf16.mxu0 0
  %241 = vmatmul.mubr.bf16.gmra.mrb[0].mxu0 %v128
  %v242 = vpop.f32.mrb[0].mxu0
  %v243 = vadd.f32 %v72, %v242
  %v244 = vpop.f32.mrb[0].mxu0
  %v245 = vpop.f32.mrb[0].mxu0
  %v246 = vadd.f32 %v72, %v245
  %v247 = vpop.f32.mrb[0].mxu0
  %248 = vmatprep.mubr.bf16.mxu0 0
  %249 = vmatmul.mubr.bf16.gmra.mrb[0].mxu0 %v131
  %v250 = vpop.f32.mrb[0].mxu0
  %v251 = vadd.f32 %v72, %v250
  %v252 = vpop.f32.mrb[0].mxu0
  %v253 = vpop.f32.mrb[0].mxu0
  %v254 = vadd.f32 %v72, %v253
  %v255 = vpop.f32.mrb[0].mxu0
  %256 = vmatprep.mubr.bf16.mxu0 0
  %257 = vmatmul.mubr.bf16.gmra.mrb[0].mxu0 %v134
  %v258 = vpop.f32.mrb[0].mxu0
  %v259 = vadd.f32 %v72, %v258
  %v260 = vpop.f32.mrb[0].mxu0
  %v261 = vadd.f32 %v76, %v260
  %v262 = vpop.f32.mrb[0].mxu0
  %v263 = vadd.f32 %v72, %v262
  %v264 = vpop.f32.mrb[0].mxu0
  %v265 = vadd.f32 %v76, %v264
  %266 = vdwg.mxu0
  %267 = vst [vmem:[#allocation2] sm:$0xff] %v171
  %268 = vst [vmem:[#allocation2 + $0x8] sm:$0xff] %v174
  %269 = vst [vmem:[#allocation2 + $0x10] sm:$0xff] %v179
  %270 = vst [vmem:[#allocation2 + $0x18] sm:$0xff] %v182
  %271 = vst [vmem:[#allocation2 + $0x20] sm:$0xff] %v187
  %272 = vst [vmem:[#allocation2 + $0x28] sm:$0xff] %v190
  %273 = vst [vmem:[#allocation2 + $0x30] sm:$0xff] %v195
  %274 = vst [vmem:[#allocation2 + $0x38] sm:$0xff] %v198
  %275 = vst [vmem:[#allocation2 + $0x40] sm:$0xff] %v203
  %276 = vst [vmem:[#allocation2 + $0x48] sm:$0xff] %v206
  %277 = vst [vmem:[#allocation2 + $0x50] sm:$0xff] %v211
  %278 = vst [vmem:[#allocation2 + $0x58] sm:$0xff] %v214
  %279 = vst [vmem:[#allocation2 + $0x60] sm:$0xff] %v219
  %280 = vst [vmem:[#allocation2 + $0x68] sm:$0xff] %v222
  %281 = vst [vmem:[#allocation2 + $0x70] sm:$0xff] %v227
  %282 = vst [vmem:[#allocation2 + $0x78] sm:$0xff] %v230
  %283 = vst [vmem:[#allocation2 + $0x80] sm:$0xff] %v235
  %284 = vst [vmem:[#allocation2 + $0x88] sm:$0xff] %v238
  %285 = vst [vmem:[#allocation2 + $0x90] sm:$0xff] %v243
  %286 = vst [vmem:[#allocation2 + $0x98] sm:$0xff] %v246
  %287 = vst [vmem:[#allocation2 + $0xa0] sm:$0xff] %v251
  %288 = vst [vmem:[#allocation2 + $0xa8] sm:$0xff] %v254
  %289 = vst [vmem:[#allocation2 + $0xb0] sm:$0xff] %v259
  %290 = vst [vmem:[#allocation2 + $0xb8] sm:$0xff] %v263
  %v291 = vld [vmem:[%s3] sm:$0xff]
  %v292 = vld [vmem:[%s3 + $0x8] sm:$0xff]
  %v293 = vld [vmem:[%s3 + $0x10] sm:$0xff]
  %v294 = vld [vmem:[%s3 + $0x18] sm:$0xff]
  %v295 = vld [vmem:[#allocation2] sm:$0xff]
  %v296 = vld [vmem:[#allocation2 + $0x8] sm:$0xff]
  %v298 = vsel %vm99, 0.0, 0
  %300 = vmatprep.subr.mxu0 0.0
  %301 = vmatpush1.msra.mxu0 %v291
  %302 = vmatprep.subr.mxu0 0.0
  %303 = vmatpush1.msra.mxu0 %v292
  %304 = vmatprep.subr.mxu0 0.0
  %305 = vmatpush1.msra.mxu0 %v293
  %306 = vmatprep.subr.mxu0 0.0
  %307 = vmatpush1.msra.mxu0 %v294
  %308 = vmatprep.subr.mxu0 0.0
  %309 = vmatpush1.msra.mxu0 0.0
  %310 = vmatprep.subr.mxu0 0.0
  %311 = vmatpush1.msra.mxu0 0.0
  %312 = vmatprep.subr.mxu0 0.0
  %313 = vmatpush1.msra.mxu0 0.0
  %314 = vmatprep.subr.mxu0 0.0
  %315 = vmatpush1.msra.mxu0 0.0
  %316 = vmatprep.subr.mxu0 0.0
  %317 = vmatpush1.msra.mxu0 0.0
  %318 = vmatprep.subr.mxu0 0.0
  %319 = vmatpush1.msra.mxu0 0.0
  %320 = vmatprep.subr.mxu0 0.0
  %321 = vmatpush1.msra.mxu0 0.0
  %322 = vmatprep.subr.mxu0 0.0
  %323 = vmatpush1.msra.mxu0 0.0
  %324 = vmatprep.subr.mxu0 0.0
  %325 = vmatpush1.msra.mxu0 0.0
  %326 = vmatprep.subr.mxu0 0.0
  %327 = vmatpush1.msra.mxu0 0.0
  %328 = vmatprep.subr.mxu0 0.0
  %329 = vmatpush1.msra.mxu0 0.0
  %330 = vmatprep.subr.mxu0 0.0
  %331 = vmatpush1.msra.mxu0 0.0
  %332 = vmatprep.subr.mxu0 0.0
  %333 = vmatpush1.msra.mxu0 0.0
  %334 = vmatprep.subr.mxu0 0.0
  %335 = vmatpush1.msra.mxu0 0.0
  %336 = vmatprep.subr.mxu0 0.0
  %337 = vmatpush1.msra.mxu0 0.0
  %338 = vmatprep.subr.mxu0 0.0
  %339 = vmatpush1.msra.mxu0 0.0
  %340 = vmatprep.subr.mxu0 0.0
  %341 = vmatpush1.msra.mxu0 0.0
  %342 = vmatprep.subr.mxu0 0.0
  %343 = vmatpush1.msra.mxu0 0.0
  %344 = vmatprep.subr.mxu0 0.0
  %345 = vmatpush1.msra.mxu0 0.0
  %346 = vmatprep.subr.mxu0 0.0
  %347 = vmatpush1.msra.mxu0 0.0
  %348 = vmatprep.subr.mxu0 0.0
  %349 = vmatpush1.msra.mxu0 0.0
  %350 = vmatprep.subr.mxu0 0.0
  %351 = vmatpush1.msra.mxu0 0.0
  %352 = vmatprep.subr.mxu0 0.0
  %353 = vmatpush1.msra.mxu0 0.0
  %354 = vmatprep.subr.mxu0 0.0
  %355 = vmatpush1.msra.mxu0 0.0
  %356 = vmatprep.subr.mxu0 0.0
  %357 = vmatpush1.msra.mxu0 0.0
  %358 = vmatprep.subr.mxu0 0.0
  %359 = vmatpush1.msra.mxu0 0.0
  %360 = vmatprep.subr.mxu0 0.0
  %361 = vmatpush1.msra.mxu0 0.0
  %362 = vmatprep.subr.mxu0 0.0
  %363 = vmatpush1.msra.mxu0 0.0
  %364 = vmatprep.mubr.f32.mxu0 0.0
  %365 = vmatmul.mubr.f32.gmra.mrb[0].mxu0 %v298
  %v366 = vpop.f32.mrb[0].mxu0
  %v367 = vadd.f32 0.0, %v366
  %v368 = vpop.f32.mrb[0].mxu0
  %369 = vmatprep.mubr.f32.mxu0 0.0
  %370 = vmatmul.mubr.f32.gmra.mrb[0].mxu0 %v298
  %v371 = vpop.f32.mrb[0].mxu0
  %v372 = vadd.f32 0.0, %v371
  %v373 = vpop.f32.mrb[0].mxu0
  %374 = vdwg.mxu0
  %v375 = vadd.f32 %v295, %v367
  %v376 = vadd.f32 %v296, %v372
  %v377 = vxor.u32 %v375, 2147483648
  %v378 = vxor.u32 %v376, 2147483648
  %v379 = vmul.f32 %v377, 1.442695
  %v380 = vpow.pop %v379
  %v381 = vmul.f32 %v378, 1.442695
  %v382 = vpow.pop %v381
  %v383 = vadd.f32 %v380, 1.0
  %v384 = vadd.f32 %v382, 1.0
  %v385 = vrcp.pop %v383
  %v386 = vmul.f32 1.0, %v385
  %v387 = vrcp.pop %v384
  %v388 = vmul.f32 1.0, %v387
  %v389 = vtanh.pop %v375
  %v390 = vtanh.pop %v376
  %v391 = vmul.f32 %v386, 0.0
  %v392 = vmul.f32 %v388, 0.0
  %395 = vrot.lane.b32.xlu0 %v389, 64
  %v396 = vpop.permute.xlu0 %395
  %397 = vrot.lane.b32.xlu0 %v390, 64
  %v398 = vpop.permute.xlu0 %397
  %v401 = vmul.f32 %v386, %v396
  %v402 = vmul.f32 %v388, %v398
  %405 = vrot.lane.b32.xlu0 %v401, 32
  %v406 = vpop.permute.xlu0 %405
  %407 = vrot.lane.b32.xlu0 %v402, 32
  %v408 = vpop.permute.xlu0 %407
  %v411 = vadd.f32 %v391, %v406
  %v412 = vadd.f32 %v392, %v408
  %v413 = vtanh.pop %v411
  %v414 = vtanh.pop %v412
  %417 = vrot.lane.b32.xlu0 %v413, 64
  %v418 = vpop.permute.xlu0 %417
  %419 = vrot.lane.b32.xlu0 %v414, 64
  %v420 = vpop.permute.xlu0 %419
  %v423 = vmul.f32 %v386, %v418
  %v424 = vmul.f32 %v388, %v420
  %s425 = scalar_lea.vmem [#allocation2], 16
  %v426 = vld [vmem:[%s425] sm:$0xff]
  %v427 = vld [vmem:[%s425 + $0x8] sm:$0xff]
  %430 = vrot.lane.b32.xlu0 %v423, 32
  %v431 = vpop.permute.xlu0 %430
  %432 = vrot.lane.b32.xlu0 %v424, 32
  %v433 = vpop.permute.xlu0 %432
  %v434 = vsel %vm99, %v431, 0
  %v436 = vsel %vm99, %v433, 0
  %438 = vmatprep.subr.mxu0 0.0
  %439 = vmatpush1.msra.mxu0 %v291
  %440 = vmatprep.subr.mxu0 0.0
  %441 = vmatpush1.msra.mxu0 %v292
  %442 = vmatprep.subr.mxu0 0.0
  %443 = vmatpush1.msra.mxu0 %v293
  %444 = vmatprep.subr.mxu0 0.0
  %445 = vmatpush1.msra.mxu0 %v294
  %446 = vmatprep.subr.mxu0 0.0
  %447 = vmatpush1.msra.mxu0 0.0
  %448 = vmatprep.subr.mxu0 0.0
  %449 = vmatpush1.msra.mxu0 0.0
  %450 = vmatprep.subr.mxu0 0.0
  %451 = vmatpush1.msra.mxu0 0.0
  %452 = vmatprep.subr.mxu0 0.0
  %453 = vmatpush1.msra.mxu0 0.0
  %454 = vmatprep.subr.mxu0 0.0
  %455 = vmatpush1.msra.mxu0 0.0
  %456 = vmatprep.subr.mxu0 0.0
  %457 = vmatpush1.msra.mxu0 0.0
  %458 = vmatprep.subr.mxu0 0.0
  %459 = vmatpush1.msra.mxu0 0.0
  %460 = vmatprep.subr.mxu0 0.0
  %461 = vmatpush1.msra.mxu0 0.0
  %462 = vmatprep.subr.mxu0 0.0
  %463 = vmatpush1.msra.mxu0 0.0
  %464 = vmatprep.subr.mxu0 0.0
  %465 = vmatpush1.msra.mxu0 0.0
  %466 = vmatprep.subr.mxu0 0.0
  %467 = vmatpush1.msra.mxu0 0.0
  %468 = vmatprep.subr.mxu0 0.0
  %469 = vmatpush1.msra.mxu0 0.0
  %470 = vmatprep.subr.mxu0 0.0
  %471 = vmatpush1.msra.mxu0 0.0
  %472 = vmatprep.subr.mxu0 0.0
  %473 = vmatpush1.msra.mxu0 0.0
  %474 = vmatprep.subr.mxu0 0.0
  %475 = vmatpush1.msra.mxu0 0.0
  %476 = vmatprep.subr.mxu0 0.0
  %477 = vmatpush1.msra.mxu0 0.0
  %478 = vmatprep.subr.mxu0 0.0
  %479 = vmatpush1.msra.mxu0 0.0
  %480 = vmatprep.subr.mxu0 0.0
  %481 = vmatpush1.msra.mxu0 0.0
  %482 = vmatprep.subr.mxu0 0.0
  %483 = vmatpush1.msra.mxu0 0.0
  %484 = vmatprep.subr.mxu0 0.0
  %485 = vmatpush1.msra.mxu0 0.0
  %486 = vmatprep.subr.mxu0 0.0
  %487 = vmatpush1.msra.mxu0 0.0
  %488 = vmatprep.subr.mxu0 0.0
  %489 = vmatpush1.msra.mxu0 0.0
  %490 = vmatprep.subr.mxu0 0.0
  %491 = vmatpush1.msra.mxu0 0.0
  %492 = vmatprep.subr.mxu0 0.0
  %493 = vmatpush1.msra.mxu0 0.0
  %494 = vmatprep.subr.mxu0 0.0
  %495 = vmatpush1.msra.mxu0 0.0
  %496 = vmatprep.subr.mxu0 0.0
  %497 = vmatpush1.msra.mxu0 0.0
  %498 = vmatprep.subr.mxu0 0.0
  %499 = vmatpush1.msra.mxu0 0.0
  %500 = vmatprep.subr.mxu0 0.0
  %501 = vmatpush1.msra.mxu0 0.0
  %502 = vmatprep.mubr.f32.mxu0 0.0
  %503 = vmatmul.mubr.f32.gmra.mrb[0].mxu0 %v434
  %v504 = vpop.f32.mrb[0].mxu0
  %v505 = vadd.f32 0.0, %v504
  %v506 = vpop.f32.mrb[0].mxu0
  %507 = vmatprep.mubr.f32.mxu0 0.0
  %508 = vmatmul.mubr.f32.gmra.mrb[0].mxu0 %v436
  %v509 = vpop.f32.mrb[0].mxu0
  %v510 = vadd.f32 0.0, %v509
  %v511 = vpop.f32.mrb[0].mxu0
  %512 = vdwg.mxu0
  %v513 = vadd.f32 %v426, %v505
  %v514 = vadd.f32 %v427, %v510
  %v515 = vxor.u32 %v513, 2147483648
  %v516 = vxor.u32 %v514, 2147483648
  %v517 = vmul.f32 %v515, 1.442695
  %v518 = vpow.pop %v517
  %v519 = vmul.f32 %v516, 1.442695
  %v520 = vpow.pop %v519
  %v521 = vadd.f32 %v518, 1.0
  %v522 = vadd.f32 %v520, 1.0
  %v523 = vrcp.pop %v521
  %v524 = vmul.f32 1.0, %v523
  %v525 = vrcp.pop %v522
  %v526 = vmul.f32 1.0, %v525
  %v527 = vtanh.pop %v513
  %v528 = vtanh.pop %v514
  %v529 = vmul.f32 %v524, %v411
  %v530 = vmul.f32 %v526, %v412
  %533 = vrot.lane.b32.xlu0 %v527, 64
  %v534 = vpop.permute.xlu0 %533
  %535 = vrot.lane.b32.xlu0 %v528, 64
  %v536 = vpop.permute.xlu0 %535
  %v539 = vmul.f32 %v524, %v534
  %v540 = vmul.f32 %v526, %v536
  %543 = vrot.lane.b32.xlu0 %v539, 32
  %v544 = vpop.permute.xlu0 %543
  %545 = vrot.lane.b32.xlu0 %v540, 32
  %v546 = vpop.permute.xlu0 %545
  %v549 = vadd.f32 %v529, %v544
  %v550 = vadd.f32 %v530, %v546
  %v551 = vtanh.pop %v549
  %v552 = vtanh.pop %v550
  %555 = vrot.lane.b32.xlu0 %v551, 64
  %v556 = vpop.permute.xlu0 %555
  %557 = vrot.lane.b32.xlu0 %v552, 64
  %v558 = vpop.permute.xlu0 %557
  %v561 = vmul.f32 %v524, %v556
  %v562 = vmul.f32 %v526, %v558
  %s563 = scalar_lea.vmem [#allocation2], 32
  %v564 = vld [vmem:[%s563] sm:$0xff]
  %v565 = vld [vmem:[%s563 + $0x8] sm:$0xff]
  %568 = vrot.lane.b32.xlu0 %v561, 32
  %v569 = vpop.permute.xlu0 %568
  %570 = vrot.lane.b32.xlu0 %v562, 32
  %v571 = vpop.permute.xlu0 %570
  %v572 = vsel %vm99, %v569, 0
  %v574 = vsel %vm99, %v571, 0
  %576 = vmatprep.subr.mxu0 0.0
  %577 = vmatpush1.msra.mxu0 %v291
  %578 = vmatprep.subr.mxu0 0.0
  %579 = vmatpush1.msra.mxu0 %v292
  %580 = vmatprep.subr.mxu0 0.0
  %581 = vmatpush1.msra.mxu0 %v293
  %582 = vmatprep.subr.mxu0 0.0
  %583 = vmatpush1.msra.mxu0 %v294
  %584 = vmatprep.subr.mxu0 0.0
  %585 = vmatpush1.msra.mxu0 0.0
  %586 = vmatprep.subr.mxu0 0.0
  %587 = vmatpush1.msra.mxu0 0.0
  %588 = vmatprep.subr.mxu0 0.0
  %589 = vmatpush1.msra.mxu0 0.0
  %590 = vmatprep.subr.mxu0 0.0
  %591 = vmatpush1.msra.mxu0 0.0
  %592 = vmatprep.subr.mxu0 0.0
  %593 = vmatpush1.msra.mxu0 0.0
  %594 = vmatprep.subr.mxu0 0.0
  %595 = vmatpush1.msra.mxu0 0.0
  %596 = vmatprep.subr.mxu0 0.0
  %597 = vmatpush1.msra.mxu0 0.0
  %598 = vmatprep.subr.mxu0 0.0
  %599 = vmatpush1.msra.mxu0 0.0
  %600 = vmatprep.subr.mxu0 0.0
  %601 = vmatpush1.msra.mxu0 0.0
  %602 = vmatprep.subr.mxu0 0.0
  %603 = vmatpush1.msra.mxu0 0.0
  %604 = vmatprep.subr.mxu0 0.0
  %605 = vmatpush1.msra.mxu0 0.0
  %606 = vmatprep.subr.mxu0 0.0
  %607 = vmatpush1.msra.mxu0 0.0
  %608 = vmatprep.subr.mxu0 0.0
  %609 = vmatpush1.msra.mxu0 0.0
  %610 = vmatprep.subr.mxu0 0.0
  %611 = vmatpush1.msra.mxu0 0.0
  %612 = vmatprep.subr.mxu0 0.0
  %613 = vmatpush1.msra.mxu0 0.0
  %614 = vmatprep.subr.mxu0 0.0
  %615 = vmatpush1.msra.mxu0 0.0
  %616 = vmatprep.subr.mxu0 0.0
  %617 = vmatpush1.msra.mxu0 0.0
  %618 = vmatprep.subr.mxu0 0.0
  %619 = vmatpush1.msra.mxu0 0.0
  %620 = vmatprep.subr.mxu0 0.0
  %621 = vmatpush1.msra.mxu0 0.0
  %622 = vmatprep.subr.mxu0 0.0
  %623 = vmatpush1.msra.mxu0 0.0
  %624 = vmatprep.subr.mxu0 0.0
  %625 = vmatpush1.msra.mxu0 0.0
  %626 = vmatprep.subr.mxu0 0.0
  %627 = vmatpush1.msra.mxu0 0.0
  %628 = vmatprep.subr.mxu0 0.0
  %629 = vmatpush1.msra.mxu0 0.0
  %630 = vmatprep.subr.mxu0 0.0
  %631 = vmatpush1.msra.mxu0 0.0
  %632 = vmatprep.subr.mxu0 0.0
  %633 = vmatpush1.msra.mxu0 0.0
  %634 = vmatprep.subr.mxu0 0.0
  %635 = vmatpush1.msra.mxu0 0.0
  %636 = vmatprep.subr.mxu0 0.0
  %637 = vmatpush1.msra.mxu0 0.0
  %638 = vmatprep.subr.mxu0 0.0
  %639 = vmatpush1.msra.mxu0 0.0
  %640 = vmatprep.mubr.f32.mxu0 0.0
  %641 = vmatmul.mubr.f32.gmra.mrb[0].mxu0 %v572
  %v642 = vpop.f32.mrb[0].mxu0
  %v643 = vadd.f32 0.0, %v642
  %v644 = vpop.f32.mrb[0].mxu0
  %645 = vmatprep.mubr.f32.mxu0 0.0
  %646 = vmatmul.mubr.f32.gmra.mrb[0].mxu0 %v574
  %v647 = vpop.f32.mrb[0].mxu0
  %v648 = vadd.f32 0.0, %v647
  %v649 = vpop.f32.mrb[0].mxu0
  %650 = vdwg.mxu0
  %v651 = vadd.f32 %v564, %v643
  %v652 = vadd.f32 %v565, %v648
  %v653 = vxor.u32 %v651, 2147483648
  %v654 = vxor.u32 %v652, 2147483648
  %v655 = vmul.f32 %v653, 1.442695
  %v656 = vpow.pop %v655
  %v657 = vmul.f32 %v654, 1.442695
  %v658 = vpow.pop %v657
  %v659 = vadd.f32 %v656, 1.0
  %v660 = vadd.f32 %v658, 1.0
  %v661 = vrcp.pop %v659
  %v662 = vmul.f32 1.0, %v661
  %v663 = vrcp.pop %v660
  %v664 = vmul.f32 1.0, %v663
  %v665 = vtanh.pop %v651
  %v666 = vtanh.pop %v652
  %v667 = vmul.f32 %v662, %v549
  %v668 = vmul.f32 %v664, %v550
  %671 = vrot.lane.b32.xlu0 %v665, 64
  %v672 = vpop.permute.xlu0 %671
  %673 = vrot.lane.b32.xlu0 %v666, 64
  %v674 = vpop.permute.xlu0 %673
  %v677 = vmul.f32 %v662, %v672
  %v678 = vmul.f32 %v664, %v674
  %681 = vrot.lane.b32.xlu0 %v677, 32
  %v682 = vpop.permute.xlu0 %681
  %683 = vrot.lane.b32.xlu0 %v678, 32
  %v684 = vpop.permute.xlu0 %683
  %v687 = vadd.f32 %v667, %v682
  %v688 = vadd.f32 %v668, %v684
  %v689 = vtanh.pop %v687
  %v690 = vtanh.pop %v688
  %693 = vrot.lane.b32.xlu0 %v689, 64
  %v694 = vpop.permute.xlu0 %693
  %695 = vrot.lane.b32.xlu0 %v690, 64
  %v696 = vpop.permute.xlu0 %695
  %v699 = vmul.f32 %v662, %v694
  %v700 = vmul.f32 %v664, %v696
  %s701 = scalar_lea.vmem [#allocation2], 48
  %v702 = vld [vmem:[%s701] sm:$0xff]
  %v703 = vld [vmem:[%s701 + $0x8] sm:$0xff]
  %706 = vrot.lane.b32.xlu0 %v699, 32
  %v707 = vpop.permute.xlu0 %706
  %708 = vrot.lane.b32.xlu0 %v700, 32
  %v709 = vpop.permute.xlu0 %708
  %v710 = vsel %vm99, %v707, 0
  %v712 = vsel %vm99, %v709, 0
  %714 = vmatprep.subr.mxu0 0.0
  %715 = vmatpush1.msra.mxu0 %v291
  %716 = vmatprep.subr.mxu0 0.0
  %717 = vmatpush1.msra.mxu0 %v292
  %718 = vmatprep.subr.mxu0 0.0
  %719 = vmatpush1.msra.mxu0 %v293
  %720 = vmatprep.subr.mxu0 0.0
  %721 = vmatpush1.msra.mxu0 %v294
  %722 = vmatprep.subr.mxu0 0.0
  %723 = vmatpush1.msra.mxu0 0.0
  %724 = vmatprep.subr.mxu0 0.0
  %725 = vmatpush1.msra.mxu0 0.0
  %726 = vmatprep.subr.mxu0 0.0
  %727 = vmatpush1.msra.mxu0 0.0
  %728 = vmatprep.subr.mxu0 0.0
  %729 = vmatpush1.msra.mxu0 0.0
  %730 = vmatprep.subr.mxu0 0.0
  %731 = vmatpush1.msra.mxu0 0.0
  %732 = vmatprep.subr.mxu0 0.0
  %733 = vmatpush1.msra.mxu0 0.0
  %734 = vmatprep.subr.mxu0 0.0
  %735 = vmatpush1.msra.mxu0 0.0
  %736 = vmatprep.subr.mxu0 0.0
  %737 = vmatpush1.msra.mxu0 0.0
  %738 = vmatprep.subr.mxu0 0.0
  %739 = vmatpush1.msra.mxu0 0.0
  %740 = vmatprep.subr.mxu0 0.0
  %741 = vmatpush1.msra.mxu0 0.0
  %742 = vmatprep.subr.mxu0 0.0
  %743 = vmatpush1.msra.mxu0 0.0
  %744 = vmatprep.subr.mxu0 0.0
  %745 = vmatpush1.msra.mxu0 0.0
  %746 = vmatprep.subr.mxu0 0.0
  %747 = vmatpush1.msra.mxu0 0.0
  %748 = vmatprep.subr.mxu0 0.0
  %749 = vmatpush1.msra.mxu0 0.0
  %750 = vmatprep.subr.mxu0 0.0
  %751 = vmatpush1.msra.mxu0 0.0
  %752 = vmatprep.subr.mxu0 0.0
  %753 = vmatpush1.msra.mxu0 0.0
  %754 = vmatprep.subr.mxu0 0.0
  %755 = vmatpush1.msra.mxu0 0.0
  %756 = vmatprep.subr.mxu0 0.0
  %757 = vmatpush1.msra.mxu0 0.0
  %758 = vmatprep.subr.mxu0 0.0
  %759 = vmatpush1.msra.mxu0 0.0
  %760 = vmatprep.subr.mxu0 0.0
  %761 = vmatpush1.msra.mxu0 0.0
  %762 = vmatprep.subr.mxu0 0.0
  %763 = vmatpush1.msra.mxu0 0.0
  %764 = vmatprep.subr.mxu0 0.0
  %765 = vmatpush1.msra.mxu0 0.0
  %766 = vmatprep.subr.mxu0 0.0
  %767 = vmatpush1.msra.mxu0 0.0
  %768 = vmatprep.subr.mxu0 0.0
  %769 = vmatpush1.msra.mxu0 0.0
  %770 = vmatprep.subr.mxu0 0.0
  %771 = vmatpush1.msra.mxu0 0.0
  %772 = vmatprep.subr.mxu0 0.0
  %773 = vmatpush1.msra.mxu0 0.0
  %774 = vmatprep.subr.mxu0 0.0
  %775 = vmatpush1.msra.mxu0 0.0
  %776 = vmatprep.subr.mxu0 0.0
  %777 = vmatpush1.msra.mxu0 0.0
  %778 = vmatprep.mubr.f32.mxu0 0.0
  %779 = vmatmul.mubr.f32.gmra.mrb[0].mxu0 %v710
  %v780 = vpop.f32.mrb[0].mxu0
  %v781 = vadd.f32 0.0, %v780
  %v782 = vpop.f32.mrb[0].mxu0
  %783 = vmatprep.mubr.f32.mxu0 0.0
  %784 = vmatmul.mubr.f32.gmra.mrb[0].mxu0 %v712
  %v785 = vpop.f32.mrb[0].mxu0
  %v786 = vadd.f32 0.0, %v785
  %v787 = vpop.f32.mrb[0].mxu0
  %788 = vdwg.mxu0
  %v789 = vadd.f32 %v702, %v781
  %v790 = vadd.f32 %v703, %v786
  %v791 = vxor.u32 %v789, 2147483648
  %v792 = vxor.u32 %v790, 2147483648
  %v793 = vmul.f32 %v791, 1.442695
  %v794 = vpow.pop %v793
  %v795 = vmul.f32 %v792, 1.442695
  %v796 = vpow.pop %v795
  %v797 = vadd.f32 %v794, 1.0
  %v798 = vadd.f32 %v796, 1.0
  %v799 = vrcp.pop %v797
  %v800 = vmul.f32 1.0, %v799
  %v801 = vrcp.pop %v798
  %v802 = vmul.f32 1.0, %v801
  %v803 = vtanh.pop %v789
  %v804 = vtanh.pop %v790
  %v805 = vmul.f32 %v800, %v687
  %v806 = vmul.f32 %v802, %v688
  %809 = vrot.lane.b32.xlu0 %v803, 64
  %v810 = vpop.permute.xlu0 %809
  %811 = vrot.lane.b32.xlu0 %v804, 64
  %v812 = vpop.permute.xlu0 %811
  %v815 = vmul.f32 %v800, %v810
  %v816 = vmul.f32 %v802, %v812
  %819 = vrot.lane.b32.xlu0 %v815, 32
  %v820 = vpop.permute.xlu0 %819
  %821 = vrot.lane.b32.xlu0 %v816, 32
  %v822 = vpop.permute.xlu0 %821
  %v825 = vadd.f32 %v805, %v820
  %v826 = vadd.f32 %v806, %v822
  %v827 = vtanh.pop %v825
  %v828 = vtanh.pop %v826
  %831 = vrot.lane.b32.xlu0 %v827, 64
  %v832 = vpop.permute.xlu0 %831
  %833 = vrot.lane.b32.xlu0 %v828, 64
  %v834 = vpop.permute.xlu0 %833
  %v837 = vmul.f32 %v800, %v832
  %v838 = vmul.f32 %v802, %v834
  %s839 = scalar_lea.vmem [#allocation2], 64
  %v840 = vld [vmem:[%s839] sm:$0xff]
  %v841 = vld [vmem:[%s839 + $0x8] sm:$0xff]
  %844 = vrot.lane.b32.xlu0 %v837, 32
  %v845 = vpop.permute.xlu0 %844
  %846 = vrot.lane.b32.xlu0 %v838, 32
  %v847 = vpop.permute.xlu0 %846
  %v848 = vsel %vm99, %v845, 0
  %v850 = vsel %vm99, %v847, 0
  %852 = vmatprep.subr.mxu0 0.0
  %853 = vmatpush1.msra.mxu0 %v291
  %854 = vmatprep.subr.mxu0 0.0
  %855 = vmatpush1.msra.mxu0 %v292
  %856 = vmatprep.subr.mxu0 0.0
  %857 = vmatpush1.msra.mxu0 %v293
  %858 = vmatprep.subr.mxu0 0.0
  %859 = vmatpush1.msra.mxu0 %v294
  %860 = vmatprep.subr.mxu0 0.0
  %861 = vmatpush1.msra.mxu0 0.0
  %862 = vmatprep.subr.mxu0 0.0
  %863 = vmatpush1.msra.mxu0 0.0
  %864 = vmatprep.subr.mxu0 0.0
  %865 = vmatpush1.msra.mxu0 0.0
  %866 = vmatprep.subr.mxu0 0.0
  %867 = vmatpush1.msra.mxu0 0.0
  %868 = vmatprep.subr.mxu0 0.0
  %869 = vmatpush1.msra.mxu0 0.0
  %870 = vmatprep.subr.mxu0 0.0
  %871 = vmatpush1.msra.mxu0 0.0
  %872 = vmatprep.subr.mxu0 0.0
  %873 = vmatpush1.msra.mxu0 0.0
  %874 = vmatprep.subr.mxu0 0.0
  %875 = vmatpush1.msra.mxu0 0.0
  %876 = vmatprep.subr.mxu0 0.0
  %877 = vmatpush1.msra.mxu0 0.0
  %878 = vmatprep.subr.mxu0 0.0
  %879 = vmatpush1.msra.mxu0 0.0
  %880 = vmatprep.subr.mxu0 0.0
  %881 = vmatpush1.msra.mxu0 0.0
  %882 = vmatprep.subr.mxu0 0.0
  %883 = vmatpush1.msra.mxu0 0.0
  %884 = vmatprep.subr.mxu0 0.0
  %885 = vmatpush1.msra.mxu0 0.0
  %886 = vmatprep.subr.mxu0 0.0
  %887 = vmatpush1.msra.mxu0 0.0
  %888 = vmatprep.subr.mxu0 0.0
  %889 = vmatpush1.msra.mxu0 0.0
  %890 = vmatprep.subr.mxu0 0.0
  %891 = vmatpush1.msra.mxu0 0.0
  %892 = vmatprep.subr.mxu0 0.0
  %893 = vmatpush1.msra.mxu0 0.0
  %894 = vmatprep.subr.mxu0 0.0
  %895 = vmatpush1.msra.mxu0 0.0
  %896 = vmatprep.subr.mxu0 0.0
  %897 = vmatpush1.msra.mxu0 0.0
  %898 = vmatprep.subr.mxu0 0.0
  %899 = vmatpush1.msra.mxu0 0.0
  %900 = vmatprep.subr.mxu0 0.0
  %901 = vmatpush1.msra.mxu0 0.0
  %902 = vmatprep.subr.mxu0 0.0
  %903 = vmatpush1.msra.mxu0 0.0
  %904 = vmatprep.subr.mxu0 0.0
  %905 = vmatpush1.msra.mxu0 0.0
  %906 = vmatprep.subr.mxu0 0.0
  %907 = vmatpush1.msra.mxu0 0.0
  %908 = vmatprep.subr.mxu0 0.0
  %909 = vmatpush1.msra.mxu0 0.0
  %910 = vmatprep.subr.mxu0 0.0
  %911 = vmatpush1.msra.mxu0 0.0
  %912 = vmatprep.subr.mxu0 0.0
  %913 = vmatpush1.msra.mxu0 0.0
  %914 = vmatprep.subr.mxu0 0.0
  %915 = vmatpush1.msra.mxu0 0.0
  %916 = vmatprep.mubr.f32.mxu0 0.0
  %917 = vmatmul.mubr.f32.gmra.mrb[0].mxu0 %v848
  %v918 = vpop.f32.mrb[0].mxu0
  %v919 = vadd.f32 0.0, %v918
  %v920 = vpop.f32.mrb[0].mxu0
  %921 = vmatprep.mubr.f32.mxu0 0.0
  %922 = vmatmul.mubr.f32.gmra.mrb[0].mxu0 %v850
  %v923 = vpop.f32.mrb[0].mxu0
  %v924 = vadd.f32 0.0, %v923
  %v925 = vpop.f32.mrb[0].mxu0
  %926 = vdwg.mxu0
  %v927 = vadd.f32 %v840, %v919
  %v928 = vadd.f32 %v841, %v924
  %v929 = vxor.u32 %v927, 2147483648
  %v930 = vxor.u32 %v928, 2147483648
  %v931 = vmul.f32 %v929, 1.442695
  %v932 = vpow.pop %v931
  %v933 = vmul.f32 %v930, 1.442695
  %v934 = vpow.pop %v933
  %v935 = vadd.f32 %v932, 1.0
  %v936 = vadd.f32 %v934, 1.0
  %v937 = vrcp.pop %v935
  %v938 = vmul.f32 1.0, %v937
  %v939 = vrcp.pop %v936
  %v940 = vmul.f32 1.0, %v939
  %v941 = vtanh.pop %v927
  %v942 = vtanh.pop %v928
  %v943 = vmul.f32 %v938, %v825
  %v944 = vmul.f32 %v940, %v826
  %947 = vrot.lane.b32.xlu0 %v941, 64
  %v948 = vpop.permute.xlu0 %947
  %949 = vrot.lane.b32.xlu0 %v942, 64
  %v950 = vpop.permute.xlu0 %949
  %v953 = vmul.f32 %v938, %v948
  %v954 = vmul.f32 %v940, %v950
  %957 = vrot.lane.b32.xlu0 %v953, 32
  %v958 = vpop.permute.xlu0 %957
  %959 = vrot.lane.b32.xlu0 %v954, 32
  %v960 = vpop.permute.xlu0 %959
  %v963 = vadd.f32 %v943, %v958
  %v964 = vadd.f32 %v944, %v960
  %v965 = vtanh.pop %v963
  %v966 = vtanh.pop %v964
  %969 = vrot.lane.b32.xlu0 %v965, 64
  %v970 = vpop.permute.xlu0 %969
  %971 = vrot.lane.b32.xlu0 %v966, 64
  %v972 = vpop.permute.xlu0 %971
  %v975 = vmul.f32 %v938, %v970
  %v976 = vmul.f32 %v940, %v972
  %s977 = scalar_lea.vmem [#allocation2], 80
  %v978 = vld [vmem:[%s977] sm:$0xff]
  %v979 = vld [vmem:[%s977 + $0x8] sm:$0xff]
  %982 = vrot.lane.b32.xlu0 %v975, 32
  %v983 = vpop.permute.xlu0 %982
  %984 = vrot.lane.b32.xlu0 %v976, 32
  %v985 = vpop.permute.xlu0 %984
  %v986 = vsel %vm99, %v983, 0
  %v988 = vsel %vm99, %v985, 0
  %990 = vmatprep.subr.mxu0 0.0
  %991 = vmatpush1.msra.mxu0 %v291
  %992 = vmatprep.subr.mxu0 0.0
  %993 = vmatpush1.msra.mxu0 %v292
  %994 = vmatprep.subr.mxu0 0.0
  %995 = vmatpush1.msra.mxu0 %v293
  %996 = vmatprep.subr.mxu0 0.0
  %997 = vmatpush1.msra.mxu0 %v294
  %998 = vmatprep.subr.mxu0 0.0
  %999 = vmatpush1.msra.mxu0 0.0
  %1000 = vmatprep.subr.mxu0 0.0
  %1001 = vmatpush1.msra.mxu0 0.0
  %1002 = vmatprep.subr.mxu0 0.0
  %1003 = vmatpush1.msra.mxu0 0.0
  %1004 = vmatprep.subr.mxu0 0.0
  %1005 = vmatpush1.msra.mxu0 0.0
  %1006 = vmatprep.subr.mxu0 0.0
  %1007 = vmatpush1.msra.mxu0 0.0
  %1008 = vmatprep.subr.mxu0 0.0
  %1009 = vmatpush1.msra.mxu0 0.0
  %1010 = vmatprep.subr.mxu0 0.0
  %1011 = vmatpush1.msra.mxu0 0.0
  %1012 = vmatprep.subr.mxu0 0.0
  %1013 = vmatpush1.msra.mxu0 0.0
  %1014 = vmatprep.subr.mxu0 0.0
  %1015 = vmatpush1.msra.mxu0 0.0
  %1016 = vmatprep.subr.mxu0 0.0
  %1017 = vmatpush1.msra.mxu0 0.0
  %1018 = vmatprep.subr.mxu0 0.0
  %1019 = vmatpush1.msra.mxu0 0.0
  %1020 = vmatprep.subr.mxu0 0.0
  %1021 = vmatpush1.msra.mxu0 0.0
  %1022 = vmatprep.subr.mxu0 0.0
  %1023 = vmatpush1.msra.mxu0 0.0
  %1024 = vmatprep.subr.mxu0 0.0
  %1025 = vmatpush1.msra.mxu0 0.0
  %1026 = vmatprep.subr.mxu0 0.0
  %1027 = vmatpush1.msra.mxu0 0.0
  %1028 = vmatprep.subr.mxu0 0.0
  %1029 = vmatpush1.msra.mxu0 0.0
  %1030 = vmatprep.subr.mxu0 0.0
  %1031 = vmatpush1.msra.mxu0 0.0
  %1032 = vmatprep.subr.mxu0 0.0
  %1033 = vmatpush1.msra.mxu0 0.0
  %1034 = vmatprep.subr.mxu0 0.0
  %1035 = vmatpush1.msra.mxu0 0.0
  %1036 = vmatprep.subr.mxu0 0.0
  %1037 = vmatpush1.msra.mxu0 0.0
  %1038 = vmatprep.subr.mxu0 0.0
  %1039 = vmatpush1.msra.mxu0 0.0
  %1040 = vmatprep.subr.mxu0 0.0
  %1041 = vmatpush1.msra.mxu0 0.0
  %1042 = vmatprep.subr.mxu0 0.0
  %1043 = vmatpush1.msra.mxu0 0.0
  %1044 = vmatprep.subr.mxu0 0.0
  %1045 = vmatpush1.msra.mxu0 0.0
  %1046 = vmatprep.subr.mxu0 0.0
  %1047 = vmatpush1.msra.mxu0 0.0
  %1048 = vmatprep.subr.mxu0 0.0
  %1049 = vmatpush1.msra.mxu0 0.0
  %1050 = vmatprep.subr.mxu0 0.0
  %1051 = vmatpush1.msra.mxu0 0.0
  %1052 = vmatprep.subr.mxu0 0.0
  %1053 = vmatpush1.msra.mxu0 0.0
  %1054 = vmatprep.mubr.f32.mxu0 0.0
  %1055 = vmatmul.mubr.f32.gmra.mrb[0].mxu0 %v986
  %v1056 = vpop.f32.mrb[0].mxu0
  %v1057 = vadd.f32 0.0, %v1056
  %v1058 = vpop.f32.mrb[0].mxu0
  %1059 = vmatprep.mubr.f32.mxu0 0.0
  %1060 = vmatmul.mubr.f32.gmra.mrb[0].mxu0 %v988
  %v1061 = vpop.f32.mrb[0].mxu0
  %v1062 = vadd.f32 0.0, %v1061
  %v1063 = vpop.f32.mrb[0].mxu0
  %1064 = vdwg.mxu0
  %v1065 = vadd.f32 %v978, %v1057
  %v1066 = vadd.f32 %v979, %v1062
  %v1067 = vxor.u32 %v1065, 2147483648
  %v1068 = vxor.u32 %v1066, 2147483648
  %v1069 = vmul.f32 %v1067, 1.442695
  %v1070 = vpow.pop %v1069
  %v1071 = vmul.f32 %v1068, 1.442695
  %v1072 = vpow.pop %v1071
  %v1073 = vadd.f32 %v1070, 1.0
  %v1074 = vadd.f32 %v1072, 1.0
  %v1075 = vrcp.pop %v1073
  %v1076 = vmul.f32 1.0, %v1075
  %v1077 = vrcp.pop %v1074
  %v1078 = vmul.f32 1.0, %v1077
  %v1079 = vtanh.pop %v1065
  %v1080 = vtanh.pop %v1066
  %v1081 = vmul.f32 %v1076, %v963
  %v1082 = vmul.f32 %v1078, %v964
  %1085 = vrot.lane.b32.xlu0 %v1079, 64
  %v1086 = vpop.permute.xlu0 %1085
  %1087 = vrot.lane.b32.xlu0 %v1080, 64
  %v1088 = vpop.permute.xlu0 %1087
  %v1091 = vmul.f32 %v1076, %v1086
  %v1092 = vmul.f32 %v1078, %v1088
  %1095 = vrot.lane.b32.xlu0 %v1091, 32
  %v1096 = vpop.permute.xlu0 %1095
  %1097 = vrot.lane.b32.xlu0 %v1092, 32
  %v1098 = vpop.permute.xlu0 %1097
  %v1101 = vadd.f32 %v1081, %v1096
  %v1102 = vadd.f32 %v1082, %v1098
  %v1103 = vtanh.pop %v1101
  %v1104 = vtanh.pop %v1102
  %1107 = vrot.lane.b32.xlu0 %v1103, 64
  %v1108 = vpop.permute.xlu0 %1107
  %1109 = vrot.lane.b32.xlu0 %v1104, 64
  %v1110 = vpop.permute.xlu0 %1109
  %v1113 = vmul.f32 %v1076, %v1108
  %v1114 = vmul.f32 %v1078, %v1110
  %s1115 = scalar_lea.vmem [#allocation2], 96
  %v1116 = vld [vmem:[%s1115] sm:$0xff]
  %v1117 = vld [vmem:[%s1115 + $0x8] sm:$0xff]
  %1120 = vrot.lane.b32.xlu0 %v1113, 32
  %v1121 = vpop.permute.xlu0 %1120
  %1122 = vrot.lane.b32.xlu0 %v1114, 32
  %v1123 = vpop.permute.xlu0 %1122
  %v1124 = vsel %vm99, %v1121, 0
  %v1126 = vsel %vm99, %v1123, 0
  %1128 = vmatprep.subr.mxu0 0.0
  %1129 = vmatpush1.msra.mxu0 %v291
  %1130 = vmatprep.subr.mxu0 0.0
  %1131 = vmatpush1.msra.mxu0 %v292
  %1132 = vmatprep.subr.mxu0 0.0
  %1133 = vmatpush1.msra.mxu0 %v293
  %1134 = vmatprep.subr.mxu0 0.0
  %1135 = vmatpush1.msra.mxu0 %v294
  %1136 = vmatprep.subr.mxu0 0.0
  %1137 = vmatpush1.msra.mxu0 0.0
  %1138 = vmatprep.subr.mxu0 0.0
  %1139 = vmatpush1.msra.mxu0 0.0
  %1140 = vmatprep.subr.mxu0 0.0
  %1141 = vmatpush1.msra.mxu0 0.0
  %1142 = vmatprep.subr.mxu0 0.0
  %1143 = vmatpush1.msra.mxu0 0.0
  %1144 = vmatprep.subr.mxu0 0.0
  %1145 = vmatpush1.msra.mxu0 0.0
  %1146 = vmatprep.subr.mxu0 0.0
  %1147 = vmatpush1.msra.mxu0 0.0
  %1148 = vmatprep.subr.mxu0 0.0
  %1149 = vmatpush1.msra.mxu0 0.0
  %1150 = vmatprep.subr.mxu0 0.0
  %1151 = vmatpush1.msra.mxu0 0.0
  %1152 = vmatprep.subr.mxu0 0.0
  %1153 = vmatpush1.msra.mxu0 0.0
  %1154 = vmatprep.subr.mxu0 0.0
  %1155 = vmatpush1.msra.mxu0 0.0
  %1156 = vmatprep.subr.mxu0 0.0
  %1157 = vmatpush1.msra.mxu0 0.0
  %1158 = vmatprep.subr.mxu0 0.0
  %1159 = vmatpush1.msra.mxu0 0.0
  %1160 = vmatprep.subr.mxu0 0.0
  %1161 = vmatpush1.msra.mxu0 0.0
  %1162 = vmatprep.subr.mxu0 0.0
  %1163 = vmatpush1.msra.mxu0 0.0
  %1164 = vmatprep.subr.mxu0 0.0
  %1165 = vmatpush1.msra.mxu0 0.0
  %1166 = vmatprep.subr.mxu0 0.0
  %1167 = vmatpush1.msra.mxu0 0.0
  %1168 = vmatprep.subr.mxu0 0.0
  %1169 = vmatpush1.msra.mxu0 0.0
  %1170 = vmatprep.subr.mxu0 0.0
  %1171 = vmatpush1.msra.mxu0 0.0
  %1172 = vmatprep.subr.mxu0 0.0
  %1173 = vmatpush1.msra.mxu0 0.0
  %1174 = vmatprep.subr.mxu0 0.0
  %1175 = vmatpush1.msra.mxu0 0.0
  %1176 = vmatprep.subr.mxu0 0.0
  %1177 = vmatpush1.msra.mxu0 0.0
  %1178 = vmatprep.subr.mxu0 0.0
  %1179 = vmatpush1.msra.mxu0 0.0
  %1180 = vmatprep.subr.mxu0 0.0
  %1181 = vmatpush1.msra.mxu0 0.0
  %1182 = vmatprep.subr.mxu0 0.0
  %1183 = vmatpush1.msra.mxu0 0.0
  %1184 = vmatprep.subr.mxu0 0.0
  %1185 = vmatpush1.msra.mxu0 0.0
  %1186 = vmatprep.subr.mxu0 0.0
  %1187 = vmatpush1.msra.mxu0 0.0
  %1188 = vmatprep.subr.mxu0 0.0
  %1189 = vmatpush1.msra.mxu0 0.0
  %1190 = vmatprep.subr.mxu0 0.0
  %1191 = vmatpush1.msra.mxu0 0.0
  %1192 = vmatprep.mubr.f32.mxu0 0.0
  %1193 = vmatmul.mubr.f32.gmra.mrb[0].mxu0 %v1124
  %v1194 = vpop.f32.mrb[0].mxu0
  %v1195 = vadd.f32 0.0, %v1194
  %v1196 = vpop.f32.mrb[0].mxu0
  %1197 = vmatprep.mubr.f32.mxu0 0.0
  %1198 = vmatmul.mubr.f32.gmra.mrb[0].mxu0 %v1126
  %v1199 = vpop.f32.mrb[0].mxu0
  %v1200 = vadd.f32 0.0, %v1199
  %v1201 = vpop.f32.mrb[0].mxu0
  %1202 = vdwg.mxu0
  %v1203 = vadd.f32 %v1116, %v1195
  %v1204 = vadd.f32 %v1117, %v1200
  %v1205 = vxor.u32 %v1203, 2147483648
  %v1206 = vxor.u32 %v1204, 2147483648
  %v1207 = vmul.f32 %v1205, 1.442695
  %v1208 = vpow.pop %v1207
  %v1209 = vmul.f32 %v1206, 1.442695
  %v1210 = vpow.pop %v1209
  %v1211 = vadd.f32 %v1208, 1.0
  %v1212 = vadd.f32 %v1210, 1.0
  %v1213 = vrcp.pop %v1211
  %v1214 = vmul.f32 1.0, %v1213
  %v1215 = vrcp.pop %v1212
  %v1216 = vmul.f32 1.0, %v1215
  %v1217 = vtanh.pop %v1203
  %v1218 = vtanh.pop %v1204
  %v1219 = vmul.f32 %v1214, %v1101
  %v1220 = vmul.f32 %v1216, %v1102
  %1223 = vrot.lane.b32.xlu0 %v1217, 64
  %v1224 = vpop.permute.xlu0 %1223
  %1225 = vrot.lane.b32.xlu0 %v1218, 64
  %v1226 = vpop.permute.xlu0 %1225
  %v1229 = vmul.f32 %v1214, %v1224
  %v1230 = vmul.f32 %v1216, %v1226
  %1233 = vrot.lane.b32.xlu0 %v1229, 32
  %v1234 = vpop.permute.xlu0 %1233
  %1235 = vrot.lane.b32.xlu0 %v1230, 32
  %v1236 = vpop.permute.xlu0 %1235
  %v1239 = vadd.f32 %v1219, %v1234
  %v1240 = vadd.f32 %v1220, %v1236
  %v1241 = vtanh.pop %v1239
  %v1242 = vtanh.pop %v1240
  %1245 = vrot.lane.b32.xlu0 %v1241, 64
  %v1246 = vpop.permute.xlu0 %1245
  %1247 = vrot.lane.b32.xlu0 %v1242, 64
  %v1248 = vpop.permute.xlu0 %1247
  %v1251 = vmul.f32 %v1214, %v1246
  %v1252 = vmul.f32 %v1216, %v1248
  %s1253 = scalar_lea.vmem [#allocation2], 112
  %v1254 = vld [vmem:[%s1253] sm:$0xff]
  %v1255 = vld [vmem:[%s1253 + $0x8] sm:$0xff]
  %1258 = vrot.lane.b32.xlu0 %v1251, 32
  %v1259 = vpop.permute.xlu0 %1258
  %1260 = vrot.lane.b32.xlu0 %v1252, 32
  %v1261 = vpop.permute.xlu0 %1260
  %v1262 = vsel %vm99, %v1259, 0
  %v1264 = vsel %vm99, %v1261, 0
  %1266 = vmatprep.subr.mxu0 0.0
  %1267 = vmatpush1.msra.mxu0 %v291
  %1268 = vmatprep.subr.mxu0 0.0
  %1269 = vmatpush1.msra.mxu0 %v292
  %1270 = vmatprep.subr.mxu0 0.0
  %1271 = vmatpush1.msra.mxu0 %v293
  %1272 = vmatprep.subr.mxu0 0.0
  %1273 = vmatpush1.msra.mxu0 %v294
  %1274 = vmatprep.subr.mxu0 0.0
  %1275 = vmatpush1.msra.mxu0 0.0
  %1276 = vmatprep.subr.mxu0 0.0
  %1277 = vmatpush1.msra.mxu0 0.0
  %1278 = vmatprep.subr.mxu0 0.0
  %1279 = vmatpush1.msra.mxu0 0.0
  %1280 = vmatprep.subr.mxu0 0.0
  %1281 = vmatpush1.msra.mxu0 0.0
  %1282 = vmatprep.subr.mxu0 0.0
  %1283 = vmatpush1.msra.mxu0 0.0
  %1284 = vmatprep.subr.mxu0 0.0
  %1285 = vmatpush1.msra.mxu0 0.0
  %1286 = vmatprep.subr.mxu0 0.0
  %1287 = vmatpush1.msra.mxu0 0.0
  %1288 = vmatprep.subr.mxu0 0.0
  %1289 = vmatpush1.msra.mxu0 0.0
  %1290 = vmatprep.subr.mxu0 0.0
  %1291 = vmatpush1.msra.mxu0 0.0
  %1292 = vmatprep.subr.mxu0 0.0
  %1293 = vmatpush1.msra.mxu0 0.0
  %1294 = vmatprep.subr.mxu0 0.0
  %1295 = vmatpush1.msra.mxu0 0.0
  %1296 = vmatprep.subr.mxu0 0.0
  %1297 = vmatpush1.msra.mxu0 0.0
  %1298 = vmatprep.subr.mxu0 0.0
  %1299 = vmatpush1.msra.mxu0 0.0
  %1300 = vmatprep.subr.mxu0 0.0
  %1301 = vmatpush1.msra.mxu0 0.0
  %1302 = vmatprep.subr.mxu0 0.0
  %1303 = vmatpush1.msra.mxu0 0.0
  %1304 = vmatprep.subr.mxu0 0.0
  %1305 = vmatpush1.msra.mxu0 0.0
  %1306 = vmatprep.subr.mxu0 0.0
  %1307 = vmatpush1.msra.mxu0 0.0
  %1308 = vmatprep.subr.mxu0 0.0
  %1309 = vmatpush1.msra.mxu0 0.0
  %1310 = vmatprep.subr.mxu0 0.0
  %1311 = vmatpush1.msra.mxu0 0.0
  %1312 = vmatprep.subr.mxu0 0.0
  %1313 = vmatpush1.msra.mxu0 0.0
  %1314 = vmatprep.subr.mxu0 0.0
  %1315 = vmatpush1.msra.mxu0 0.0
  %1316 = vmatprep.subr.mxu0 0.0
  %1317 = vmatpush1.msra.mxu0 0.0
  %1318 = vmatprep.subr.mxu0 0.0
  %1319 = vmatpush1.msra.mxu0 0.0
  %1320 = vmatprep.subr.mxu0 0.0
  %1321 = vmatpush1.msra.mxu0 0.0
  %1322 = vmatprep.subr.mxu0 0.0
  %1323 = vmatpush1.msra.mxu0 0.0
  %1324 = vmatprep.subr.mxu0 0.0
  %1325 = vmatpush1.msra.mxu0 0.0
  %1326 = vmatprep.subr.mxu0 0.0
  %1327 = vmatpush1.msra.mxu0 0.0
  %1328 = vmatprep.subr.mxu0 0.0
  %1329 = vmatpush1.msra.mxu0 0.0
  %1330 = vmatprep.mubr.f32.mxu0 0.0
  %1331 = vmatmul.mubr.f32.gmra.mrb[0].mxu0 %v1262
  %v1332 = vpop.f32.mrb[0].mxu0
  %v1333 = vadd.f32 0.0, %v1332
  %v1334 = vpop.f32.mrb[0].mxu0
  %1335 = vmatprep.mubr.f32.mxu0 0.0
  %1336 = vmatmul.mubr.f32.gmra.mrb[0].mxu0 %v1264
  %v1337 = vpop.f32.mrb[0].mxu0
  %v1338 = vadd.f32 0.0, %v1337
  %v1339 = vpop.f32.mrb[0].mxu0
  %1340 = vdwg.mxu0
  %v1341 = vadd.f32 %v1254, %v1333
  %v1342 = vadd.f32 %v1255, %v1338
  %v1343 = vxor.u32 %v1341, 2147483648
  %v1344 = vxor.u32 %v1342, 2147483648
  %v1345 = vmul.f32 %v1343, 1.442695
  %v1346 = vpow.pop %v1345
  %v1347 = vmul.f32 %v1344, 1.442695
  %v1348 = vpow.pop %v1347
  %v1349 = vadd.f32 %v1346, 1.0
  %v1350 = vadd.f32 %v1348, 1.0
  %v1351 = vrcp.pop %v1349
  %v1352 = vmul.f32 1.0, %v1351
  %v1353 = vrcp.pop %v1350
  %v1354 = vmul.f32 1.0, %v1353
  %v1355 = vtanh.pop %v1341
  %v1356 = vtanh.pop %v1342
  %v1357 = vmul.f32 %v1352, %v1239
  %v1358 = vmul.f32 %v1354, %v1240
  %1361 = vrot.lane.b32.xlu0 %v1355, 64
  %v1362 = vpop.permute.xlu0 %1361
  %1363 = vrot.lane.b32.xlu0 %v1356, 64
  %v1364 = vpop.permute.xlu0 %1363
  %v1367 = vmul.f32 %v1352, %v1362
  %v1368 = vmul.f32 %v1354, %v1364
  %1371 = vrot.lane.b32.xlu0 %v1367, 32
  %v1372 = vpop.permute.xlu0 %1371
  %1373 = vrot.lane.b32.xlu0 %v1368, 32
  %v1374 = vpop.permute.xlu0 %1373
  %v1377 = vadd.f32 %v1357, %v1372
  %v1378 = vadd.f32 %v1358, %v1374
  %v1379 = vtanh.pop %v1377
  %v1380 = vtanh.pop %v1378
  %1383 = vrot.lane.b32.xlu0 %v1379, 64
  %v1384 = vpop.permute.xlu0 %1383
  %1385 = vrot.lane.b32.xlu0 %v1380, 64
  %v1386 = vpop.permute.xlu0 %1385
  %v1389 = vmul.f32 %v1352, %v1384
  %v1390 = vmul.f32 %v1354, %v1386
  %s1391 = scalar_lea.vmem [#allocation2], 128
  %v1392 = vld [vmem:[%s1391] sm:$0xff]
  %v1393 = vld [vmem:[%s1391 + $0x8] sm:$0xff]
  %1396 = vrot.lane.b32.xlu0 %v1389, 32
  %v1397 = vpop.permute.xlu0 %1396
  %1398 = vrot.lane.b32.xlu0 %v1390, 32
  %v1399 = vpop.permute.xlu0 %1398
  %v1400 = vsel %vm99, %v1397, 0
  %v1402 = vsel %vm99, %v1399, 0
  %1404 = vmatprep.subr.mxu0 0.0
  %1405 = vmatpush1.msra.mxu0 %v291
  %1406 = vmatprep.subr.mxu0 0.0
  %1407 = vmatpush1.msra.mxu0 %v292
  %1408 = vmatprep.subr.mxu0 0.0
  %1409 = vmatpush1.msra.mxu0 %v293
  %1410 = vmatprep.subr.mxu0 0.0
  %1411 = vmatpush1.msra.mxu0 %v294
  %1412 = vmatprep.subr.mxu0 0.0
  %1413 = vmatpush1.msra.mxu0 0.0
  %1414 = vmatprep.subr.mxu0 0.0
  %1415 = vmatpush1.msra.mxu0 0.0
  %1416 = vmatprep.subr.mxu0 0.0
  %1417 = vmatpush1.msra.mxu0 0.0
  %1418 = vmatprep.subr.mxu0 0.0
  %1419 = vmatpush1.msra.mxu0 0.0
  %1420 = vmatprep.subr.mxu0 0.0
  %1421 = vmatpush1.msra.mxu0 0.0
  %1422 = vmatprep.subr.mxu0 0.0
  %1423 = vmatpush1.msra.mxu0 0.0
  %1424 = vmatprep.subr.mxu0 0.0
  %1425 = vmatpush1.msra.mxu0 0.0
  %1426 = vmatprep.subr.mxu0 0.0
  %1427 = vmatpush1.msra.mxu0 0.0
  %1428 = vmatprep.subr.mxu0 0.0
  %1429 = vmatpush1.msra.mxu0 0.0
  %1430 = vmatprep.subr.mxu0 0.0
  %1431 = vmatpush1.msra.mxu0 0.0
  %1432 = vmatprep.subr.mxu0 0.0
  %1433 = vmatpush1.msra.mxu0 0.0
  %1434 = vmatprep.subr.mxu0 0.0
  %1435 = vmatpush1.msra.mxu0 0.0
  %1436 = vmatprep.subr.mxu0 0.0
  %1437 = vmatpush1.msra.mxu0 0.0
  %1438 = vmatprep.subr.mxu0 0.0
  %1439 = vmatpush1.msra.mxu0 0.0
  %1440 = vmatprep.subr.mxu0 0.0
  %1441 = vmatpush1.msra.mxu0 0.0
  %1442 = vmatprep.subr.mxu0 0.0
  %1443 = vmatpush1.msra.mxu0 0.0
  %1444 = vmatprep.subr.mxu0 0.0
  %1445 = vmatpush1.msra.mxu0 0.0
  %1446 = vmatprep.subr.mxu0 0.0
  %1447 = vmatpush1.msra.mxu0 0.0
  %1448 = vmatprep.subr.mxu0 0.0
  %1449 = vmatpush1.msra.mxu0 0.0
  %1450 = vmatprep.subr.mxu0 0.0
  %1451 = vmatpush1.msra.mxu0 0.0
  %1452 = vmatprep.subr.mxu0 0.0
  %1453 = vmatpush1.msra.mxu0 0.0
  %1454 = vmatprep.subr.mxu0 0.0
  %1455 = vmatpush1.msra.mxu0 0.0
  %1456 = vmatprep.subr.mxu0 0.0
  %1457 = vmatpush1.msra.mxu0 0.0
  %1458 = vmatprep.subr.mxu0 0.0
  %1459 = vmatpush1.msra.mxu0 0.0
  %1460 = vmatprep.subr.mxu0 0.0
  %1461 = vmatpush1.msra.mxu0 0.0
  %1462 = vmatprep.subr.mxu0 0.0
  %1463 = vmatpush1.msra.mxu0 0.0
  %1464 = vmatprep.subr.mxu0 0.0
  %1465 = vmatpush1.msra.mxu0 0.0
  %1466 = vmatprep.subr.mxu0 0.0
  %1467 = vmatpush1.msra.mxu0 0.0
  %1468 = vmatprep.mubr.f32.mxu0 0.0
  %1469 = vmatmul.mubr.f32.gmra.mrb[0].mxu0 %v1400
  %v1470 = vpop.f32.mrb[0].mxu0
  %v1471 = vadd.f32 0.0, %v1470
  %v1472 = vpop.f32.mrb[0].mxu0
  %1473 = vmatprep.mubr.f32.mxu0 0.0
  %1474 = vmatmul.mubr.f32.gmra.mrb[0].mxu0 %v1402
  %v1475 = vpop.f32.mrb[0].mxu0
  %v1476 = vadd.f32 0.0, %v1475
  %v1477 = vpop.f32.mrb[0].mxu0
  %1478 = vdwg.mxu0
  %v1479 = vadd.f32 %v1392, %v1471
  %v1480 = vadd.f32 %v1393, %v1476
  %v1481 = vxor.u32 %v1479, 2147483648
  %v1482 = vxor.u32 %v1480, 2147483648
  %v1483 = vmul.f32 %v1481, 1.442695
  %v1484 = vpow.pop %v1483
  %v1485 = vmul.f32 %v1482, 1.442695
  %v1486 = vpow.pop %v1485
  %v1487 = vadd.f32 %v1484, 1.0
  %v1488 = vadd.f32 %v1486, 1.0
  %v1489 = vrcp.pop %v1487
  %v1490 = vmul.f32 1.0, %v1489
  %v1491 = vrcp.pop %v1488
  %v1492 = vmul.f32 1.0, %v1491
  %v1493 = vtanh.pop %v1479
  %v1494 = vtanh.pop %v1480
  %v1495 = vmul.f32 %v1490, %v1377
  %v1496 = vmul.f32 %v1492, %v1378
  %1499 = vrot.lane.b32.xlu0 %v1493, 64
  %v1500 = vpop.permute.xlu0 %1499
  %1501 = vrot.lane.b32.xlu0 %v1494, 64
  %v1502 = vpop.permute.xlu0 %1501
  %v1505 = vmul.f32 %v1490, %v1500
  %v1506 = vmul.f32 %v1492, %v1502
  %1509 = vrot.lane.b32.xlu0 %v1505, 32
  %v1510 = vpop.permute.xlu0 %1509
  %1511 = vrot.lane.b32.xlu0 %v1506, 32
  %v1512 = vpop.permute.xlu0 %1511
  %v1515 = vadd.f32 %v1495, %v1510
  %v1516 = vadd.f32 %v1496, %v1512
  %v1517 = vtanh.pop %v1515
  %v1518 = vtanh.pop %v1516
  %1521 = vrot.lane.b32.xlu0 %v1517, 64
  %v1522 = vpop.permute.xlu0 %1521
  %1523 = vrot.lane.b32.xlu0 %v1518, 64
  %v1524 = vpop.permute.xlu0 %1523
  %v1527 = vmul.f32 %v1490, %v1522
  %v1528 = vmul.f32 %v1492, %v1524
  %s1529 = scalar_lea.vmem [#allocation2], 144
  %v1530 = vld [vmem:[%s1529] sm:$0xff]
  %v1531 = vld [vmem:[%s1529 + $0x8] sm:$0xff]
  %1534 = vrot.lane.b32.xlu0 %v1527, 32
  %v1535 = vpop.permute.xlu0 %1534
  %1536 = vrot.lane.b32.xlu0 %v1528, 32
  %v1537 = vpop.permute.xlu0 %1536
  %v1538 = vsel %vm99, %v1535, 0
  %v1540 = vsel %vm99, %v1537, 0
  %1542 = vmatprep.subr.mxu0 0.0
  %1543 = vmatpush1.msra.mxu0 %v291
  %1544 = vmatprep.subr.mxu0 0.0
  %1545 = vmatpush1.msra.mxu0 %v292
  %1546 = vmatprep.subr.mxu0 0.0
  %1547 = vmatpush1.msra.mxu0 %v293
  %1548 = vmatprep.subr.mxu0 0.0
  %1549 = vmatpush1.msra.mxu0 %v294
  %1550 = vmatprep.subr.mxu0 0.0
  %1551 = vmatpush1.msra.mxu0 0.0
  %1552 = vmatprep.subr.mxu0 0.0
  %1553 = vmatpush1.msra.mxu0 0.0
  %1554 = vmatprep.subr.mxu0 0.0
  %1555 = vmatpush1.msra.mxu0 0.0
  %1556 = vmatprep.subr.mxu0 0.0
  %1557 = vmatpush1.msra.mxu0 0.0
  %1558 = vmatprep.subr.mxu0 0.0
  %1559 = vmatpush1.msra.mxu0 0.0
  %1560 = vmatprep.subr.mxu0 0.0
  %1561 = vmatpush1.msra.mxu0 0.0
  %1562 = vmatprep.subr.mxu0 0.0
  %1563 = vmatpush1.msra.mxu0 0.0
  %1564 = vmatprep.subr.mxu0 0.0
  %1565 = vmatpush1.msra.mxu0 0.0
  %1566 = vmatprep.subr.mxu0 0.0
  %1567 = vmatpush1.msra.mxu0 0.0
  %1568 = vmatprep.subr.mxu0 0.0
  %1569 = vmatpush1.msra.mxu0 0.0
  %1570 = vmatprep.subr.mxu0 0.0
  %1571 = vmatpush1.msra.mxu0 0.0
  %1572 = vmatprep.subr.mxu0 0.0
  %1573 = vmatpush1.msra.mxu0 0.0
  %1574 = vmatprep.subr.mxu0 0.0
  %1575 = vmatpush1.msra.mxu0 0.0
  %1576 = vmatprep.subr.mxu0 0.0
  %1577 = vmatpush1.msra.mxu0 0.0
  %1578 = vmatprep.subr.mxu0 0.0
  %1579 = vmatpush1.msra.mxu0 0.0
  %1580 = vmatprep.subr.mxu0 0.0
  %1581 = vmatpush1.msra.mxu0 0.0
  %1582 = vmatprep.subr.mxu0 0.0
  %1583 = vmatpush1.msra.mxu0 0.0
  %1584 = vmatprep.subr.mxu0 0.0
  %1585 = vmatpush1.msra.mxu0 0.0
  %1586 = vmatprep.subr.mxu0 0.0
  %1587 = vmatpush1.msra.mxu0 0.0
  %1588 = vmatprep.subr.mxu0 0.0
  %1589 = vmatpush1.msra.mxu0 0.0
  %1590 = vmatprep.subr.mxu0 0.0
  %1591 = vmatpush1.msra.mxu0 0.0
  %1592 = vmatprep.subr.mxu0 0.0
  %1593 = vmatpush1.msra.mxu0 0.0
  %1594 = vmatprep.subr.mxu0 0.0
  %1595 = vmatpush1.msra.mxu0 0.0
  %1596 = vmatprep.subr.mxu0 0.0
  %1597 = vmatpush1.msra.mxu0 0.0
  %1598 = vmatprep.subr.mxu0 0.0
  %1599 = vmatpush1.msra.mxu0 0.0
  %1600 = vmatprep.subr.mxu0 0.0
  %1601 = vmatpush1.msra.mxu0 0.0
  %1602 = vmatprep.subr.mxu0 0.0
  %1603 = vmatpush1.msra.mxu0 0.0
  %1604 = vmatprep.subr.mxu0 0.0
  %1605 = vmatpush1.msra.mxu0 0.0
  %1606 = vmatprep.mubr.f32.mxu0 0.0
  %1607 = vmatmul.mubr.f32.gmra.mrb[0].mxu0 %v1538
  %v1608 = vpop.f32.mrb[0].mxu0
  %v1609 = vadd.f32 0.0, %v1608
  %v1610 = vpop.f32.mrb[0].mxu0
  %1611 = vmatprep.mubr.f32.mxu0 0.0
  %1612 = vmatmul.mubr.f32.gmra.mrb[0].mxu0 %v1540
  %v1613 = vpop.f32.mrb[0].mxu0
  %v1614 = vadd.f32 0.0, %v1613
  %v1615 = vpop.f32.mrb[0].mxu0
  %1616 = vdwg.mxu0
  %v1617 = vadd.f32 %v1530, %v1609
  %v1618 = vadd.f32 %v1531, %v1614
  %v1619 = vxor.u32 %v1617, 2147483648
  %v1620 = vxor.u32 %v1618, 2147483648
  %v1621 = vmul.f32 %v1619, 1.442695
  %v1622 = vpow.pop %v1621
  %v1623 = vmul.f32 %v1620, 1.442695
  %v1624 = vpow.pop %v1623
  %v1625 = vadd.f32 %v1622, 1.0
  %v1626 = vadd.f32 %v1624, 1.0
  %v1627 = vrcp.pop %v1625
  %v1628 = vmul.f32 1.0, %v1627
  %v1629 = vrcp.pop %v1626
  %v1630 = vmul.f32 1.0, %v1629
  %v1631 = vtanh.pop %v1617
  %v1632 = vtanh.pop %v1618
  %v1633 = vmul.f32 %v1628, %v1515
  %v1634 = vmul.f32 %v1630, %v1516
  %1637 = vrot.lane.b32.xlu0 %v1631, 64
  %v1638 = vpop.permute.xlu0 %1637
  %1639 = vrot.lane.b32.xlu0 %v1632, 64
  %v1640 = vpop.permute.xlu0 %1639
  %v1643 = vmul.f32 %v1628, %v1638
  %v1644 = vmul.f32 %v1630, %v1640
  %1647 = vrot.lane.b32.xlu0 %v1643, 32
  %v1648 = vpop.permute.xlu0 %1647
  %1649 = vrot.lane.b32.xlu0 %v1644, 32
  %v1650 = vpop.permute.xlu0 %1649
  %v1653 = vadd.f32 %v1633, %v1648
  %v1654 = vadd.f32 %v1634, %v1650
  %v1655 = vtanh.pop %v1653
  %v1656 = vtanh.pop %v1654
  %1659 = vrot.lane.b32.xlu0 %v1655, 64
  %v1660 = vpop.permute.xlu0 %1659
  %1661 = vrot.lane.b32.xlu0 %v1656, 64
  %v1662 = vpop.permute.xlu0 %1661
  %v1665 = vmul.f32 %v1628, %v1660
  %v1666 = vmul.f32 %v1630, %v1662
  %s1667 = scalar_lea.vmem [#allocation2], 160
  %v1668 = vld [vmem:[%s1667] sm:$0xff]
  %v1669 = vld [vmem:[%s1667 + $0x8] sm:$0xff]
  %1672 = vrot.lane.b32.xlu0 %v1665, 32
  %v1673 = vpop.permute.xlu0 %1672
  %1674 = vrot.lane.b32.xlu0 %v1666, 32
  %v1675 = vpop.permute.xlu0 %1674
  %v1676 = vsel %vm99, %v1673, 0
  %v1678 = vsel %vm99, %v1675, 0
  %1680 = vmatprep.subr.mxu0 0.0
  %1681 = vmatpush1.msra.mxu0 %v291
  %1682 = vmatprep.subr.mxu0 0.0
  %1683 = vmatpush1.msra.mxu0 %v292
  %1684 = vmatprep.subr.mxu0 0.0
  %1685 = vmatpush1.msra.mxu0 %v293
  %1686 = vmatprep.subr.mxu0 0.0
  %1687 = vmatpush1.msra.mxu0 %v294
  %1688 = vmatprep.subr.mxu0 0.0
  %1689 = vmatpush1.msra.mxu0 0.0
  %1690 = vmatprep.subr.mxu0 0.0
  %1691 = vmatpush1.msra.mxu0 0.0
  %1692 = vmatprep.subr.mxu0 0.0
  %1693 = vmatpush1.msra.mxu0 0.0
  %1694 = vmatprep.subr.mxu0 0.0
  %1695 = vmatpush1.msra.mxu0 0.0
  %1696 = vmatprep.subr.mxu0 0.0
  %1697 = vmatpush1.msra.mxu0 0.0
  %1698 = vmatprep.subr.mxu0 0.0
  %1699 = vmatpush1.msra.mxu0 0.0
  %1700 = vmatprep.subr.mxu0 0.0
  %1701 = vmatpush1.msra.mxu0 0.0
  %1702 = vmatprep.subr.mxu0 0.0
  %1703 = vmatpush1.msra.mxu0 0.0
  %1704 = vmatprep.subr.mxu0 0.0
  %1705 = vmatpush1.msra.mxu0 0.0
  %1706 = vmatprep.subr.mxu0 0.0
  %1707 = vmatpush1.msra.mxu0 0.0
  %1708 = vmatprep.subr.mxu0 0.0
  %1709 = vmatpush1.msra.mxu0 0.0
  %1710 = vmatprep.subr.mxu0 0.0
  %1711 = vmatpush1.msra.mxu0 0.0
  %1712 = vmatprep.subr.mxu0 0.0
  %1713 = vmatpush1.msra.mxu0 0.0
  %1714 = vmatprep.subr.mxu0 0.0
  %1715 = vmatpush1.msra.mxu0 0.0
  %1716 = vmatprep.subr.mxu0 0.0
  %1717 = vmatpush1.msra.mxu0 0.0
  %1718 = vmatprep.subr.mxu0 0.0
  %1719 = vmatpush1.msra.mxu0 0.0
  %1720 = vmatprep.subr.mxu0 0.0
  %1721 = vmatpush1.msra.mxu0 0.0
  %1722 = vmatprep.subr.mxu0 0.0
  %1723 = vmatpush1.msra.mxu0 0.0
  %1724 = vmatprep.subr.mxu0 0.0
  %1725 = vmatpush1.msra.mxu0 0.0
  %1726 = vmatprep.subr.mxu0 0.0
  %1727 = vmatpush1.msra.mxu0 0.0
  %1728 = vmatprep.subr.mxu0 0.0
  %1729 = vmatpush1.msra.mxu0 0.0
  %1730 = vmatprep.subr.mxu0 0.0
  %1731 = vmatpush1.msra.mxu0 0.0
  %1732 = vmatprep.subr.mxu0 0.0
  %1733 = vmatpush1.msra.mxu0 0.0
  %1734 = vmatprep.subr.mxu0 0.0
  %1735 = vmatpush1.msra.mxu0 0.0
  %1736 = vmatprep.subr.mxu0 0.0
  %1737 = vmatpush1.msra.mxu0 0.0
  %1738 = vmatprep.subr.mxu0 0.0
  %1739 = vmatpush1.msra.mxu0 0.0
  %1740 = vmatprep.subr.mxu0 0.0
  %1741 = vmatpush1.msra.mxu0 0.0
  %1742 = vmatprep.subr.mxu0 0.0
  %1743 = vmatpush1.msra.mxu0 0.0
  %1744 = vmatprep.mubr.f32.mxu0 0.0
  %1745 = vmatmul.mubr.f32.gmra.mrb[0].mxu0 %v1676
  %v1746 = vpop.f32.mrb[0].mxu0
  %v1747 = vadd.f32 0.0, %v1746
  %v1748 = vpop.f32.mrb[0].mxu0
  %1749 = vmatprep.mubr.f32.mxu0 0.0
  %1750 = vmatmul.mubr.f32.gmra.mrb[0].mxu0 %v1678
  %v1751 = vpop.f32.mrb[0].mxu0
  %v1752 = vadd.f32 0.0, %v1751
  %v1753 = vpop.f32.mrb[0].mxu0
  %1754 = vdwg.mxu0
  %v1755 = vadd.f32 %v1668, %v1747
  %v1756 = vadd.f32 %v1669, %v1752
  %v1757 = vxor.u32 %v1755, 2147483648
  %v1758 = vxor.u32 %v1756, 2147483648
  %v1759 = vmul.f32 %v1757, 1.442695
  %v1760 = vpow.pop %v1759
  %v1761 = vmul.f32 %v1758, 1.442695
  %v1762 = vpow.pop %v1761
  %v1763 = vadd.f32 %v1760, 1.0
  %v1764 = vadd.f32 %v1762, 1.0
  %v1765 = vrcp.pop %v1763
  %v1766 = vmul.f32 1.0, %v1765
  %v1767 = vrcp.pop %v1764
  %v1768 = vmul.f32 1.0, %v1767
  %v1769 = vtanh.pop %v1755
  %v1770 = vtanh.pop %v1756
  %v1771 = vmul.f32 %v1766, %v1653
  %v1772 = vmul.f32 %v1768, %v1654
  %1775 = vrot.lane.b32.xlu0 %v1769, 64
  %v1776 = vpop.permute.xlu0 %1775
  %1777 = vrot.lane.b32.xlu0 %v1770, 64
  %v1778 = vpop.permute.xlu0 %1777
  %v1781 = vmul.f32 %v1766, %v1776
  %v1782 = vmul.f32 %v1768, %v1778
  %1785 = vrot.lane.b32.xlu0 %v1781, 32
  %v1786 = vpop.permute.xlu0 %1785
  %1787 = vrot.lane.b32.xlu0 %v1782, 32
  %v1788 = vpop.permute.xlu0 %1787
  %v1791 = vadd.f32 %v1771, %v1786
  %v1792 = vadd.f32 %v1772, %v1788
  %v1793 = vtanh.pop %v1791
  %v1794 = vtanh.pop %v1792
  %1797 = vrot.lane.b32.xlu0 %v1793, 64
  %v1798 = vpop.permute.xlu0 %1797
  %1799 = vrot.lane.b32.xlu0 %v1794, 64
  %v1800 = vpop.permute.xlu0 %1799
  %v1803 = vmul.f32 %v1766, %v1798
  %v1804 = vmul.f32 %v1768, %v1800
  %s1805 = scalar_lea.vmem [#allocation2], 176
  %v1806 = vld [vmem:[%s1805] sm:$0xff]
  %v1807 = vld [vmem:[%s1805 + $0x8] sm:$0xff]
  %1810 = vrot.lane.b32.xlu0 %v1803, 32
  %v1811 = vpop.permute.xlu0 %1810
  %1812 = vrot.lane.b32.xlu0 %v1804, 32
  %v1813 = vpop.permute.xlu0 %1812
  %v1814 = vsel %vm99, %v1811, 0
  %v1816 = vsel %vm99, %v1813, 0
  %1818 = vmatprep.subr.mxu0 0.0
  %1819 = vmatpush1.msra.mxu0 %v291
  %1820 = vmatprep.subr.mxu0 0.0
  %1821 = vmatpush1.msra.mxu0 %v292
  %1822 = vmatprep.subr.mxu0 0.0
  %1823 = vmatpush1.msra.mxu0 %v293
  %1824 = vmatprep.subr.mxu0 0.0
  %1825 = vmatpush1.msra.mxu0 %v294
  %1826 = vmatprep.subr.mxu0 0.0
  %1827 = vmatpush1.msra.mxu0 0.0
  %1828 = vmatprep.subr.mxu0 0.0
  %1829 = vmatpush1.msra.mxu0 0.0
  %1830 = vmatprep.subr.mxu0 0.0
  %1831 = vmatpush1.msra.mxu0 0.0
  %1832 = vmatprep.subr.mxu0 0.0
  %1833 = vmatpush1.msra.mxu0 0.0
  %1834 = vmatprep.subr.mxu0 0.0
  %1835 = vmatpush1.msra.mxu0 0.0
  %1836 = vmatprep.subr.mxu0 0.0
  %1837 = vmatpush1.msra.mxu0 0.0
  %1838 = vmatprep.subr.mxu0 0.0
  %1839 = vmatpush1.msra.mxu0 0.0
  %1840 = vmatprep.subr.mxu0 0.0
  %1841 = vmatpush1.msra.mxu0 0.0
  %1842 = vmatprep.subr.mxu0 0.0
  %1843 = vmatpush1.msra.mxu0 0.0
  %1844 = vmatprep.subr.mxu0 0.0
  %1845 = vmatpush1.msra.mxu0 0.0
  %1846 = vmatprep.subr.mxu0 0.0
  %1847 = vmatpush1.msra.mxu0 0.0
  %1848 = vmatprep.subr.mxu0 0.0
  %1849 = vmatpush1.msra.mxu0 0.0
  %1850 = vmatprep.subr.mxu0 0.0
  %1851 = vmatpush1.msra.mxu0 0.0
  %1852 = vmatprep.subr.mxu0 0.0
  %1853 = vmatpush1.msra.mxu0 0.0
  %1854 = vmatprep.subr.mxu0 0.0
  %1855 = vmatpush1.msra.mxu0 0.0
  %1856 = vmatprep.subr.mxu0 0.0
  %1857 = vmatpush1.msra.mxu0 0.0
  %1858 = vmatprep.subr.mxu0 0.0
  %1859 = vmatpush1.msra.mxu0 0.0
  %1860 = vmatprep.subr.mxu0 0.0
  %1861 = vmatpush1.msra.mxu0 0.0
  %1862 = vmatprep.subr.mxu0 0.0
  %1863 = vmatpush1.msra.mxu0 0.0
  %1864 = vmatprep.subr.mxu0 0.0
  %1865 = vmatpush1.msra.mxu0 0.0
  %1866 = vmatprep.subr.mxu0 0.0
  %1867 = vmatpush1.msra.mxu0 0.0
  %1868 = vmatprep.subr.mxu0 0.0
  %1869 = vmatpush1.msra.mxu0 0.0
  %1870 = vmatprep.subr.mxu0 0.0
  %1871 = vmatpush1.msra.mxu0 0.0
  %1872 = vmatprep.subr.mxu0 0.0
  %1873 = vmatpush1.msra.mxu0 0.0
  %1874 = vmatprep.subr.mxu0 0.0
  %1875 = vmatpush1.msra.mxu0 0.0
  %1876 = vmatprep.subr.mxu0 0.0
  %1877 = vmatpush1.msra.mxu0 0.0
  %1878 = vmatprep.subr.mxu0 0.0
  %1879 = vmatpush1.msra.mxu0 0.0
  %1880 = vmatprep.subr.mxu0 0.0
  %1881 = vmatpush1.msra.mxu0 0.0
  %1882 = vmatprep.mubr.f32.mxu0 0.0
  %1883 = vmatmul.mubr.f32.gmra.mrb[0].mxu0 %v1814
  %v1884 = vpop.f32.mrb[0].mxu0
  %v1885 = vadd.f32 0.0, %v1884
  %v1886 = vpop.f32.mrb[0].mxu0
  %1887 = vmatprep.mubr.f32.mxu0 0.0
  %1888 = vmatmul.mubr.f32.gmra.mrb[0].mxu0 %v1816
  %v1889 = vpop.f32.mrb[0].mxu0
  %v1890 = vadd.f32 0.0, %v1889
  %v1891 = vpop.f32.mrb[0].mxu0
  %1892 = vdwg.mxu0
  %v1893 = vadd.f32 %v1806, %v1885
  %v1894 = vadd.f32 %v1807, %v1890
  %v1895 = vxor.u32 %v1893, 2147483648
  %v1896 = vxor.u32 %v1894, 2147483648
  %v1897 = vmul.f32 %v1895, 1.442695
  %v1898 = vpow.pop %v1897
  %v1899 = vmul.f32 %v1896, 1.442695
  %v1900 = vpow.pop %v1899
  %v1901 = vadd.f32 %v1898, 1.0
  %v1902 = vadd.f32 %v1900, 1.0
  %v1903 = vrcp.pop %v1901
  %v1904 = vmul.f32 1.0, %v1903
  %v1905 = vrcp.pop %v1902
  %v1906 = vmul.f32 1.0, %v1905
  %v1907 = vtanh.pop %v1893
  %v1908 = vtanh.pop %v1894
  %v1909 = vmul.f32 %v1904, %v1791
  %v1910 = vmul.f32 %v1906, %v1792
  %1913 = vrot.lane.b32.xlu0 %v1907, 64
  %v1914 = vpop.permute.xlu0 %1913
  %1915 = vrot.lane.b32.xlu0 %v1908, 64
  %v1916 = vpop.permute.xlu0 %1915
  %v1919 = vmul.f32 %v1904, %v1914
  %v1920 = vmul.f32 %v1906, %v1916
  %1923 = vrot.lane.b32.xlu0 %v1919, 32
  %v1924 = vpop.permute.xlu0 %1923
  %1925 = vrot.lane.b32.xlu0 %v1920, 32
  %v1926 = vpop.permute.xlu0 %1925
  %v1929 = vadd.f32 %v1909, %v1924
  %v1930 = vadd.f32 %v1910, %v1926
  %v1931 = vtanh.pop %v1929
  %v1932 = vtanh.pop %v1930
  %1935 = vrot.lane.b32.xlu0 %v1931, 64
  %v1936 = vpop.permute.xlu0 %1935
  %1937 = vrot.lane.b32.xlu0 %v1932, 64
  %v1938 = vpop.permute.xlu0 %1937
  %v1941 = vmul.f32 %v1904, %v1936
  %v1942 = vmul.f32 %v1906, %v1938
  %v1943 = vxor.u32 %v261, 2147483648
  %v1944 = vxor.u32 %v265, 2147483648
  %v1945 = vmul.f32 %v1943, 1.442695
  %v1946 = vpow.pop %v1945
  %v1947 = vmul.f32 %v1944, 1.442695
  %v1948 = vpow.pop %v1947
  %v1949 = vadd.f32 %v1946, 1.0
  %v1950 = vadd.f32 %v1948, 1.0
  %v1951 = vrcp.pop %v1949
  %v1952 = vmul.f32 1.0, %v1951
  %v1953 = vrcp.pop %v1950
  %v1954 = vmul.f32 1.0, %v1953
  %v1955 = vtanh.pop %v261
  %v1956 = vtanh.pop %v265
  %v1957 = vmul.f32 %v1952, 0.0
  %v1958 = vmul.f32 %v1954, 0.0
  %1961 = vrot.lane.b32.xlu0 %v1955, 64
  %v1962 = vpop.permute.xlu0 %1961
  %1963 = vrot.lane.b32.xlu0 %v1956, 64
  %v1964 = vpop.permute.xlu0 %1963
  %v1967 = vmul.f32 %v1952, %v1962
  %v1968 = vmul.f32 %v1954, %v1964
  %1971 = vrot.lane.b32.xlu0 %v1967, 32
  %v1972 = vpop.permute.xlu0 %1971
  %1973 = vrot.lane.b32.xlu0 %v1968, 32
  %v1974 = vpop.permute.xlu0 %1973
  %v1977 = vadd.f32 %v1957, %v1972
  %v1978 = vadd.f32 %v1958, %v1974
  %v1979 = vtanh.pop %v1977
  %v1980 = vtanh.pop %v1978
  %1983 = vrot.lane.b32.xlu0 %v1979, 64
  %v1984 = vpop.permute.xlu0 %1983
  %1985 = vrot.lane.b32.xlu0 %v1980, 64
  %v1986 = vpop.permute.xlu0 %1985
  %v1989 = vmul.f32 %v1952, %v1984
  %v1990 = vmul.f32 %v1954, %v1986
  %v1991 = vld [vmem:[%s5] sm:$0xf]
  %v1992 = vld [vmem:[%s5 + $0x4] sm:$0xf]
  %v1993 = vld [vmem:[%s5 + $0x8] sm:$0xf]
  %v1994 = vld [vmem:[%s5 + $0xc] sm:$0xf]
  %v1995 = vld [vmem:[%s5 + $0x10] sm:$0xf]
  %v1996 = vld [vmem:[%s5 + $0x14] sm:$0xf]
  %v1997 = vld [vmem:[%s5 + $0x18] sm:$0xf]
  %v1998 = vld [vmem:[%s5 + $0x1c] sm:$0xf]
  %v1999 = vpack.c.bf16 %v1942, %v1941
  %v2000 = vpack.c.bf16 %v1990, %v1989
  %2002 = vrot.lane.b32.xlu0 %v2000, 32
  %v2003 = vpop.permute.xlu0 %2002
  %v2008 = vunpack.c.l.b16 %v1995
  %v2009 = vunpack.c.l.b16 %v1996
  %v2010 = vunpack.c.l.b16 %v1997
  %v2011 = vunpack.c.l.b16 %v1998
  %v2012 = vpack.c.b16 %v2009, %v2008
  %v2013 = vpack.c.b16 %v2011, %v2010
  %v2017 = vsel %vm99, %v2003, 0
  %2019 = vmatprep.subr.bf16.mxu0 0
  %2020 = vmatpush1.bf16.msra.mxu0 %v2012
  %2021 = vmatprep.subr.bf16.mxu0 0
  %2022 = vmatpush1.bf16.msra.mxu0 %v2013
  %2023 = vmatprep.subr.bf16.mxu0 0
  %2024 = vmatpush1.bf16.msra.mxu0 0
  %2025 = vmatprep.subr.bf16.mxu0 0
  %2026 = vmatpush1.bf16.msra.mxu0 0
  %2027 = vmatprep.subr.bf16.mxu0 0
  %2028 = vmatpush1.bf16.msra.mxu0 0
  %2029 = vmatprep.subr.bf16.mxu0 0
  %2030 = vmatpush1.bf16.msra.mxu0 0
  %2031 = vmatprep.subr.bf16.mxu0 0
  %2032 = vmatpush1.bf16.msra.mxu0 0
  %2033 = vmatprep.subr.bf16.mxu0 0
  %2034 = vmatpush1.bf16.msra.mxu0 0
  %2035 = vmatprep.subr.bf16.mxu0 0
  %2036 = vmatpush1.bf16.msra.mxu0 0
  %2037 = vmatprep.subr.bf16.mxu0 0
  %2038 = vmatpush1.bf16.msra.mxu0 0
  %2039 = vmatprep.subr.bf16.mxu0 0
  %2040 = vmatpush1.bf16.msra.mxu0 0
  %2041 = vmatprep.subr.bf16.mxu0 0
  %2042 = vmatpush1.bf16.msra.mxu0 0
  %2043 = vmatprep.subr.bf16.mxu0 0
  %2044 = vmatpush1.bf16.msra.mxu0 0
  %2045 = vmatprep.subr.bf16.mxu0 0
  %2046 = vmatpush1.bf16.msra.mxu0 0
  %2047 = vmatprep.subr.bf16.mxu0 0
  %2048 = vmatpush1.bf16.msra.mxu0 0
  %2049 = vmatprep.subr.bf16.mxu0 0
  %2050 = vmatpush1.bf16.msra.mxu0 0
  %2051 = vmatprep.mubr.bf16.mxu0 0
  %2052 = vmatmul.mubr.bf16.gmra.mrb[0].mxu0 %v2017
  %v2053 = vpop.f32.mrb[0].mxu0
  %v2054 = vadd.f32 0.0, %v2053
  %v2055 = vpop.f32.mrb[0].mxu0
  %v2056 = vpop.f32.mrb[0].mxu0
  %v2057 = vadd.f32 0.0, %v2056
  %v2058 = vpop.f32.mrb[0].mxu0
  %2059 = vdwg.mxu0
  %2061 = vrot.lane.b32.xlu0 %v1999, 32
  %v2062 = vpop.permute.xlu0 %2061
  %v2067 = vunpack.c.l.b16 %v1991
  %v2068 = vunpack.c.l.b16 %v1992
  %v2069 = vunpack.c.l.b16 %v1993
  %v2070 = vunpack.c.l.b16 %v1994
  %v2071 = vpack.c.b16 %v2068, %v2067
  %v2072 = vpack.c.b16 %v2070, %v2069
  %v2076 = vsel %vm99, %v2062, 0
  %2078 = vmatprep.subr.bf16.mxu0 0
  %2079 = vmatpush1.bf16.msra.mxu0 %v2071
  %2080 = vmatprep.subr.bf16.mxu0 0
  %2081 = vmatpush1.bf16.msra.mxu0 %v2072
  %2082 = vmatprep.subr.bf16.mxu0 0
  %2083 = vmatpush1.bf16.msra.mxu0 0
  %2084 = vmatprep.subr.bf16.mxu0 0
  %2085 = vmatpush1.bf16.msra.mxu0 0
  %2086 = vmatprep.subr.bf16.mxu0 0
  %2087 = vmatpush1.bf16.msra.mxu0 0
  %2088 = vmatprep.subr.bf16.mxu0 0
  %2089 = vmatpush1.bf16.msra.mxu0 0
  %2090 = vmatprep.subr.bf16.mxu0 0
  %2091 = vmatpush1.bf16.msra.mxu0 0
  %2092 = vmatprep.subr.bf16.mxu0 0
  %2093 = vmatpush1.bf16.msra.mxu0 0
  %2094 = vmatprep.subr.bf16.mxu0 0
  %2095 = vmatpush1.bf16.msra.mxu0 0
  %2096 = vmatprep.subr.bf16.mxu0 0
  %2097 = vmatpush1.bf16.msra.mxu0 0
  %2098 = vmatprep.subr.bf16.mxu0 0
  %2099 = vmatpush1.bf16.msra.mxu0 0
  %2100 = vmatprep.subr.bf16.mxu0 0
  %2101 = vmatpush1.bf16.msra.mxu0 0
  %2102 = vmatprep.subr.bf16.mxu0 0
  %2103 = vmatpush1.bf16.msra.mxu0 0
  %2104 = vmatprep.subr.bf16.mxu0 0
  %2105 = vmatpush1.bf16.msra.mxu0 0
  %2106 = vmatprep.subr.bf16.mxu0 0
  %2107 = vmatpush1.bf16.msra.mxu0 0
  %2108 = vmatprep.subr.bf16.mxu0 0
  %2109 = vmatpush1.bf16.msra.mxu0 0
  %2110 = vmatprep.mubr.bf16.mxu0 0
  %2111 = vmatmul.mubr.bf16.gmra.mrb[0].mxu0 %v2076
  %v2112 = vpop.f32.mrb[0].mxu0
  %v2113 = vadd.f32 %v2054, %v2112
  %v2114 = vpop.f32.mrb[0].mxu0
  %v2115 = vpop.f32.mrb[0].mxu0
  %v2116 = vadd.f32 %v2057, %v2115
  %v2117 = vpop.f32.mrb[0].mxu0
  %2118 = vdwg.mxu0
  %v2119 = vld [vmem:[%s6] sm:$0x1]
  %v2121 = vlaneseq
  %v2122 = vshrl.u32 %v2121, 7
  %v2123 = vsub.s32 0, %v2122
  %v2124 = vrot.slane %v2119, %v2123
  %v2126 = vadd.f32 %v2113, %v2124
  %v2127 = vadd.f32 %v2116, %v2124
  %v2128 = vld [vmem:[%s1] sm:$0xff]
  %v2129 = vld [vmem:[%s1 + $0x8] sm:$0xff]
  %v2130 = vlaneseq
  %v2131 = vand.u32 %v2130, 127
  %2132 = vset.pattern.permute.xlu0 0
  %2133 = vperm.xlu0 %2132, %v2128
  %v2134 = vpop.permute.xlu0 %2133
  %2135 = vset.pattern.permute.xlu0 0
  %2136 = vperm.xlu0 %2135, %v2129
  %v2137 = vpop.permute.xlu0 %2136
  %vm2138 = vcmp.eq.s32.totalorder %v2131, %v2134
  %vm2139 = vcmp.eq.s32.totalorder %v2131, %v2137
  %v2140 = vsel %vm2138, 1, 0
  %v2141 = vsel %vm2139, 1, 0
  %v2142 = vcvt.s32.f32 %v2140
  %v2143 = vcvt.s32.f32 %v2141
  %2144 = vmax.xlane.f32.xlu0 %v2126
  %v2145 = vpop.xlane.xlu0 %2144
  %2146 = vmax.xlane.f32.xlu0 %v2127
  %v2147 = vpop.xlane.xlu0 %2146
  %v2148 = vsub.f32 %v2126, %v2145
  %v2149 = vsub.f32 %v2127, %v2147
  %v2150 = vmul.f32 %v2148, 1.442695
  %v2151 = vpow.pop %v2150
  %v2152 = vmul.f32 %v2149, 1.442695
  %v2153 = vpow.pop %v2152
  %2154 = vadd.xlane.f32.xlu0 %v2151
  %v2155 = vpop.xlane.xlu0 %2154
  %2156 = vadd.xlane.f32.xlu0 %v2153
  %v2157 = vpop.xlane.xlu0 %2156
  %v2158 = vlog2.pop %v2155
  %v2159 = vmul.f32 %v2158, 0.6931472
  %v2160 = vlog2.pop %v2157
  %v2161 = vmul.f32 %v2160, 0.6931472
  %v2162 = vadd.f32 %v2145, %v2159
  %v2163 = vadd.f32 %v2147, %v2161
  %v2164 = vmul.f32 %v2126, %v2142
  %v2165 = vmul.f32 %v2127, %v2143
  %2166 = vadd.xlane.f32.xlu0 %v2164
  %v2167 = vpop.xlane.xlu0 %2166
  %2168 = vadd.xlane.f32.xlu0 %v2165
  %v2169 = vpop.xlane.xlu0 %2168
  %v2170 = vsub.f32 %v2162, %v2167
  %v2171 = vsub.f32 %v2163, %v2169
  %vm2172 = vcmp.eq.s32.totalorder %v2131, 2
  %v2173 = vsel %vm2172, %v2170, %v2126
  %v2174 = vsel %vm2172, %v2171, %v2127
  %2175 = vst [vmem:[%s7] sm:$0xff] %v2173
  %2176 = vst [vmem:[%s7 + $0x8] sm:$0xff] %v2174
  // Predicated region
  $region30: #{birnn_forward.1} parent=0 // pred_check
    _
  $region31: #{birnn_forward.1} parent=0 // pred_check_branch
    %2178 = sbr.rel (0) target = $region33
  $region32: #{birnn_forward.1} parent=0 // pred_region
    _
  $region33: #{birnn_forward.1} parent=0 // pred_fallthru
    _
  // Predicated region
  $region34: #{birnn_forward.1} parent=0 // pred_check
    _
  $region35: #{birnn_forward.1} parent=0 // pred_check_branch
    %2180 = sbr.rel (0) target = $region37
  $region36: #{birnn_forward.1} parent=0 // pred_region
    _
  $region37: #{birnn_forward.1} parent=0 // pred_fallthru
    _

</llo_original>
